<compile_context>
chip_gen: v7x
topology: tpu7x:2x2x1
jax: 0.10.0
libtpu: 0.0.40
codegen_flags: <defaults>
</compile_context>

<pallas_src>
import jax
import jax.numpy as jnp
from jax import lax
from jax.experimental import pallas as pl
from jax.experimental.pallas import tpu as pltpu


def _gru_kernel(gi_ref, h0_ref, whh_ref, bhn_ref, out_ref):
    """Serial GRU recurrence over all S steps in a single program.

    gi_ref : (S, Bp, 3*Hp) f32   precomputed x-projections; b_ih fully folded,
                                 b_hh folded for the r/z gates; gate g occupies
                                 lanes [g*Hp, (g+1)*Hp).
    h0_ref : (Bp, Hp)      f32   initial hidden state (zero-padded).
    whh_ref: (Hp, 3*Hp)    bf16  recurrent weights, per-gate lane-aligned blocks.
    bhn_ref: (1, Hp)       f32   hidden bias of the n gate only.
    out_ref: (S, Bp, Hp)   f32   per-step hidden states.
    """
    S = out_ref.shape[0]
    Bp = out_ref.shape[1]
    Hp = out_ref.shape[2]

    # Loop-invariant values: load recurrent weights once (lives in vregs across
    # the whole unrolled loop) and hoist the n-gate bias broadcast.
    whh = whh_ref[...]                                    # (Hp, 3Hp) bf16
    bhn = jnp.broadcast_to(bhn_ref[...], (Bp, Hp))        # (Bp, Hp)  f32

    def step(t, h):
        gi = gi_ref[t]                                    # (Bp, 3Hp) f32
        # Recurrent projection: bf16 operands, f32 accumulation (MXU).
        gh = jnp.dot(h.astype(jnp.bfloat16), whh,
                     preferred_element_type=jnp.float32)  # (Bp, 3Hp) f32

        # Lane-aligned gate slices (Hp is a multiple of 128 -> no cross-lane
        # shuffles, pure vreg-window selects).
        r = jax.nn.sigmoid(gi[:, :Hp] + gh[:, :Hp])
        z = jax.nn.sigmoid(gi[:, Hp:2 * Hp] + gh[:, Hp:2 * Hp])
        n = jnp.tanh(gi[:, 2 * Hp:] + r * (gh[:, 2 * Hp:] + bhn))
        h_new = (1.0 - z) * n + z * h                     # f32 gate math (VPU)

        out_ref[t] = h_new.astype(out_ref.dtype)          # unmasked vst
        return h_new

    # Short fixed trip count: fully unroll so the LLO scheduler sees the whole
    # dependence chain and can overlap EUP/VPU of step t with MXU of step t+1.
    lax.fori_loop(0, S, step, h0_ref[...], unroll=True)


def encoder_rnn_forward(x, h0, w_ih, w_hh, b_ih, b_hh):
    """GRU forward (PyTorch nn.GRU semantics, gate order r, z, n).

    x:    (S, B, I) f32,  h0: (1, B, H) f32
    w_ih: (3H, I), w_hh: (3H, H), b_ih: (3H,), b_hh: (3H,)
    Returns (output (S, B, H), hidden (1, B, H)).
    """
    S, B, I = x.shape
    H = h0.shape[-1]
    LANE, SUB = 128, 8
    Hp = ((H + LANE - 1) // LANE) * LANE     # lane-pad each gate to 128
    Bp = ((B + SUB - 1) // SUB) * SUB        # sublane-pad batch to 8

    f32 = jnp.float32
    x = x.astype(f32)
    w_ih = w_ih.astype(f32)
    w_hh = w_hh.astype(f32)
    b_ih = b_ih.astype(f32)
    b_hh = b_hh.astype(f32)

    # --- Hoisted input projection for all time steps (one big matmul, XLA). ---
    # Fold b_ih fully and b_hh for the r/z gates; b_hh_n must stay separate
    # (it is applied inside r * (h_n + b_hn)).
    bias_fold = b_ih + jnp.concatenate([b_hh[:2 * H], jnp.zeros((H,), f32)])
    gi = x.reshape(S * B, I) @ w_ih.T + bias_fold                  # (S*B, 3H)
    gi = gi.reshape(S, B, 3, H)
    gi_pad = jnp.zeros((S, Bp, 3, Hp), f32).at[:, :B, :, :H].set(gi)
    gi_pad = gi_pad.reshape(S, Bp, 3 * Hp)

    # --- Recurrent weights: per-gate lane-aligned blocks, bf16 for the MXU. ---
    whh_t = w_hh.T.reshape(H, 3, H)                                # (Hin, gate, Hout)
    whh_pad = jnp.zeros((Hp, 3, Hp), f32).at[:H, :, :H].set(whh_t)
    whh_pad = whh_pad.reshape(Hp, 3 * Hp).astype(jnp.bfloat16)

    bhn_pad = jnp.zeros((1, Hp), f32).at[0, :H].set(b_hh[2 * H:])
    h0_pad = jnp.zeros((Bp, Hp), f32).at[:B, :H].set(h0[0].astype(f32))

    # Everything (gi ~96 KB, weights ~96 KB, out ~32 KB at these sizes) fits
    # trivially in VMEM -> single program, no grid, no per-step streaming.
    # TODO(synk): for long sequences / large batches, stream gi/out over a
    # sequence-chunk grid (hidden carried in a VMEM scratch) and, on v7x,
    # add a "parallel" batch grid axis to split work across the 2 TensorCores.
    vmem = pl.BlockSpec(memory_space=pltpu.MemorySpace.VMEM)
    out_pad = pl.pallas_call(
        _gru_kernel,
        out_shape=jax.ShapeDtypeStruct((S, Bp, Hp), x.dtype),
        in_specs=[vmem, vmem, vmem, vmem],
        out_specs=vmem,
    )(gi_pad, h0_pad, whh_pad, bhn_pad)

    output = out_pad[:, :B, :H].astype(x.dtype)   # (S, B, H)
    hidden = output[-1:]                          # (1, B, H) == final hidden
    return output, hidden


def _reference_gru(x, h0, w_ih, w_hh, b_ih, b_hh):
    """Pure-JAX f32 reference implementing PyTorch nn.GRU semantics."""
    H = h0.shape[-1]
    h = h0[0]
    outs = []
    for t in range(x.shape[0]):
        gi = x[t] @ w_ih.T + b_ih
        gh = h @ w_hh.T + b_hh
        i_r, i_z, i_n = gi[:, :H], gi[:, H:2 * H], gi[:, 2 * H:]
        h_r, h_z, h_n = gh[:, :H], gh[:, H:2 * H], gh[:, 2 * H:]
        r = jax.nn.sigmoid(i_r + h_r)
        z = jax.nn.sigmoid(i_z + h_z)
        n = jnp.tanh(i_n + r * h_n)
        h = (1.0 - z) * n + z * h
        outs.append(h)
    return jnp.stack(outs, axis=0), h[None]


if __name__ == "__main__":
    # Small shapes consistent with EncoderRNN: seq=8, batch=2,
    # input_size=4, hidden_size=32.
    S, B, I, H = 8, 2, 4, 32

    key = jax.random.PRNGKey(0)
    kx, kh, k1, k2, k3, k4 = jax.random.split(key, 6)

    # Deterministic parameter init (PyTorch-style U(-1/sqrt(H), 1/sqrt(H))).
    bound = 1.0 / jnp.sqrt(jnp.float32(H))
    w_ih = jax.random.uniform(k1, (3 * H, I), jnp.float32, -bound, bound)
    w_hh = jax.random.uniform(k2, (3 * H, H), jnp.float32, -bound, bound)
    b_ih = jax.random.uniform(k3, (3 * H,), jnp.float32, -bound, bound)
    b_hh = jax.random.uniform(k4, (3 * H,), jnp.float32, -bound, bound)

    x = jax.random.normal(kx, (S, B, I), jnp.float32)
    h0 = jnp.zeros((1, B, H), jnp.float32)  # == EncoderRNN.initHidden() per batch elem

    output, hidden = encoder_rnn_forward(x, h0, w_ih, w_hh, b_ih, b_hh)
    jax.block_until_ready((output, hidden))

    ref_out, ref_hid = _reference_gru(x, h0, w_ih, w_hh, b_ih, b_hh)
    assert output.shape == (S, B, H) and hidden.shape == (1, B, H)
    # Tolerance accounts for the bf16 recurrent-matmul operands (f32 accumulate).
    assert jnp.allclose(output, ref_out, atol=2e-2, rtol=2e-2)
    assert jnp.allclose(hidden, ref_hid, atol=2e-2, rtol=2e-2)

    print("KERNEL_OK")
</pallas_src>

<mosaic_0001>
module attributes {stable_mosaic.version = 11 : i64} {
  func.func @_gru_kernel(%arg0: memref<8x8x384xf32, #tpu.memory_space<vmem>>, %arg1: memref<8x128xf32, #tpu.memory_space<vmem>>, %arg2: memref<128x384xbf16, #tpu.memory_space<vmem>>, %arg3: memref<1x128xf32, #tpu.memory_space<vmem>>, %arg4: memref<8x8x128xf32, #tpu.memory_space<vmem>>) attributes {dimension_semantics = [], scalar_prefetch = 0 : i64, scratch_operands = 0 : i64, tpu.core_type = #tpu.core_type<tc>} {
    %c0 = arith.constant 0 : index
    %c0_0 = arith.constant 0 : index
    %0 = vector.load %arg2[%c0, %c0_0] : memref<128x384xbf16, #tpu.memory_space<vmem>>, vector<128x384xbf16>
    %c0_1 = arith.constant 0 : index
    %c0_2 = arith.constant 0 : index
    %1 = vector.load %arg3[%c0_1, %c0_2] : memref<1x128xf32, #tpu.memory_space<vmem>>, vector<1x128xf32>
    %2 = vector.shape_cast %1 : vector<1x128xf32> to vector<1x128xf32>
    %3 = vector.broadcast %2 : vector<1x128xf32> to vector<8x128xf32>
    %c0_3 = arith.constant 0 : index
    %c0_4 = arith.constant 0 : index
    %4 = vector.load %arg1[%c0_3, %c0_4] : memref<8x128xf32, #tpu.memory_space<vmem>>, vector<8x128xf32>
    %c0_i32 = arith.constant 0 : i32
    %5 = arith.index_cast %c0_i32 : i32 to index
    %c0_5 = arith.constant 0 : index
    %c0_6 = arith.constant 0 : index
    %6 = vector.load %arg0[%5, %c0_5, %c0_6] : memref<8x8x384xf32, #tpu.memory_space<vmem>>, vector<1x8x384xf32>
    %7 = vector.shape_cast %6 : vector<1x8x384xf32> to vector<8x384xf32>
    %8 = arith.truncf %4 : vector<8x128xf32> to vector<8x128xbf16>
    %cst = arith.constant dense<0.000000e+00> : vector<8x384xf32>
    %9 = tpu.matmul %8, %0, %cst {dimension_numbers = #tpu.dot_dimension_numbers<[1], [0], [0], [1], [0, 0, 1, 1], [], []>} : vector<8x128xbf16>, vector<128x384xbf16>, vector<8x384xf32> -> vector<8x384xf32>
    %10 = vector.extract_strided_slice %7 {offsets = [0, 0], sizes = [8, 128], strides = [1, 1]} : vector<8x384xf32> to vector<8x128xf32>
    %11 = vector.extract_strided_slice %9 {offsets = [0, 0], sizes = [8, 128], strides = [1, 1]} : vector<8x384xf32> to vector<8x128xf32>
    %12 = arith.addf %10, %11 : vector<8x128xf32>
    %13 = arith.negf %12 : vector<8x128xf32>
    %14 = math.exp %13 : vector<8x128xf32>
    %cst_7 = arith.constant 1.000000e+00 : f32
    %15 = vector.broadcast %cst_7 : f32 to vector<8x128xf32>
    %16 = arith.addf %15, %14 : vector<8x128xf32>
    %17 = arith.divf %15, %16 : vector<8x128xf32>
    %18 = vector.extract_strided_slice %7 {offsets = [0, 128], sizes = [8, 128], strides = [1, 1]} : vector<8x384xf32> to vector<8x128xf32>
    %19 = vector.extract_strided_slice %9 {offsets = [0, 128], sizes = [8, 128], strides = [1, 1]} : vector<8x384xf32> to vector<8x128xf32>
    %20 = arith.addf %18, %19 : vector<8x128xf32>
    %21 = arith.negf %20 : vector<8x128xf32>
    %22 = math.exp %21 : vector<8x128xf32>
    %cst_8 = arith.constant 1.000000e+00 : f32
    %23 = vector.broadcast %cst_8 : f32 to vector<8x128xf32>
    %24 = arith.addf %23, %22 : vector<8x128xf32>
    %25 = arith.divf %23, %24 : vector<8x128xf32>
    %26 = vector.extract_strided_slice %7 {offsets = [0, 256], sizes = [8, 128], strides = [1, 1]} : vector<8x384xf32> to vector<8x128xf32>
    %27 = vector.extract_strided_slice %9 {offsets = [0, 256], sizes = [8, 128], strides = [1, 1]} : vector<8x384xf32> to vector<8x128xf32>
    %28 = arith.addf %27, %3 : vector<8x128xf32>
    %29 = arith.mulf %17, %28 : vector<8x128xf32>
    %30 = arith.addf %26, %29 : vector<8x128xf32>
    %31 = math.tanh %30 : vector<8x128xf32>
    %cst_9 = arith.constant 1.000000e+00 : f32
    %32 = vector.broadcast %cst_9 : f32 to vector<8x128xf32>
    %33 = arith.subf %32, %25 : vector<8x128xf32>
    %34 = arith.mulf %33, %31 : vector<8x128xf32>
    %35 = arith.mulf %25, %4 : vector<8x128xf32>
    %36 = arith.addf %34, %35 : vector<8x128xf32>
    %37 = arith.index_cast %c0_i32 : i32 to index
    %c0_10 = arith.constant 0 : index
    %c0_11 = arith.constant 0 : index
    %38 = vector.load %arg4[%37, %c0_10, %c0_11] : memref<8x8x128xf32, #tpu.memory_space<vmem>>, vector<1x8x128xf32>
    %39 = vector.shape_cast %38 : vector<1x8x128xf32> to vector<8x128xf32>
    %40 = vector.shape_cast %36 : vector<8x128xf32> to vector<1x8x128xf32>
    tpu.vector_store %arg4[%37, %c0_10, %c0_11], %40 {strides = array<i32>} : memref<8x8x128xf32, #tpu.memory_space<vmem>>, vector<1x8x128xf32>,
    %c1_i32 = arith.constant 1 : i32
    %41 = arith.index_cast %c1_i32 : i32 to index
    %c0_12 = arith.constant 0 : index
    %c0_13 = arith.constant 0 : index
    %42 = vector.load %arg0[%41, %c0_12, %c0_13] : memref<8x8x384xf32, #tpu.memory_space<vmem>>, vector<1x8x384xf32>
    %43 = vector.shape_cast %42 : vector<1x8x384xf32> to vector<8x384xf32>
    %44 = arith.truncf %36 : vector<8x128xf32> to vector<8x128xbf16>
    %cst_14 = arith.constant dense<0.000000e+00> : vector<8x384xf32>
    %45 = tpu.matmul %44, %0, %cst_14 {dimension_numbers = #tpu.dot_dimension_numbers<[1], [0], [0], [1], [0, 0, 1, 1], [], []>} : vector<8x128xbf16>, vector<128x384xbf16>, vector<8x384xf32> -> vector<8x384xf32>
    %46 = vector.extract_strided_slice %43 {offsets = [0, 0], sizes = [8, 128], strides = [1, 1]} : vector<8x384xf32> to vector<8x128xf32>
    %47 = vector.extract_strided_slice %45 {offsets = [0, 0], sizes = [8, 128], strides = [1, 1]} : vector<8x384xf32> to vector<8x128xf32>
    %48 = arith.addf %46, %47 : vector<8x128xf32>
    %49 = arith.negf %48 : vector<8x128xf32>
    %50 = math.exp %49 : vector<8x128xf32>
    %cst_15 = arith.constant 1.000000e+00 : f32
    %51 = vector.broadcast %cst_15 : f32 to vector<8x128xf32>
    %52 = arith.addf %51, %50 : vector<8x128xf32>
    %53 = arith.divf %51, %52 : vector<8x128xf32>
    %54 = vector.extract_strided_slice %43 {offsets = [0, 128], sizes = [8, 128], strides = [1, 1]} : vector<8x384xf32> to vector<8x128xf32>
    %55 = vector.extract_strided_slice %45 {offsets = [0, 128], sizes = [8, 128], strides = [1, 1]} : vector<8x384xf32> to vector<8x128xf32>
    %56 = arith.addf %54, %55 : vector<8x128xf32>
    %57 = arith.negf %56 : vector<8x128xf32>
    %58 = math.exp %57 : vector<8x128xf32>
    %cst_16 = arith.constant 1.000000e+00 : f32
    %59 = vector.broadcast %cst_16 : f32 to vector<8x128xf32>
    %60 = arith.addf %59, %58 : vector<8x128xf32>
    %61 = arith.divf %59, %60 : vector<8x128xf32>
    %62 = vector.extract_strided_slice %43 {offsets = [0, 256], sizes = [8, 128], strides = [1, 1]} : vector<8x384xf32> to vector<8x128xf32>
    %63 = vector.extract_strided_slice %45 {offsets = [0, 256], sizes = [8, 128], strides = [1, 1]} : vector<8x384xf32> to vector<8x128xf32>
    %64 = arith.addf %63, %3 : vector<8x128xf32>
    %65 = arith.mulf %53, %64 : vector<8x128xf32>
    %66 = arith.addf %62, %65 : vector<8x128xf32>
    %67 = math.tanh %66 : vector<8x128xf32>
    %cst_17 = arith.constant 1.000000e+00 : f32
    %68 = vector.broadcast %cst_17 : f32 to vector<8x128xf32>
    %69 = arith.subf %68, %61 : vector<8x128xf32>
    %70 = arith.mulf %69, %67 : vector<8x128xf32>
    %71 = arith.mulf %61, %36 : vector<8x128xf32>
    %72 = arith.addf %70, %71 : vector<8x128xf32>
    %73 = arith.index_cast %c1_i32 : i32 to index
    %c0_18 = arith.constant 0 : index
    %c0_19 = arith.constant 0 : index
    %74 = vector.load %arg4[%73, %c0_18, %c0_19] : memref<8x8x128xf32, #tpu.memory_space<vmem>>, vector<1x8x128xf32>
    %75 = vector.shape_cast %74 : vector<1x8x128xf32> to vector<8x128xf32>
    %76 = vector.shape_cast %72 : vector<8x128xf32> to vector<1x8x128xf32>
    tpu.vector_store %arg4[%73, %c0_18, %c0_19], %76 {strides = array<i32>} : memref<8x8x128xf32, #tpu.memory_space<vmem>>, vector<1x8x128xf32>,
    %c2_i32 = arith.constant 2 : i32
    %77 = arith.index_cast %c2_i32 : i32 to index
    %c0_20 = arith.constant 0 : index
    %c0_21 = arith.constant 0 : index
    %78 = vector.load %arg0[%77, %c0_20, %c0_21] : memref<8x8x384xf32, #tpu.memory_space<vmem>>, vector<1x8x384xf32>
    %79 = vector.shape_cast %78 : vector<1x8x384xf32> to vector<8x384xf32>
    %80 = arith.truncf %72 : vector<8x128xf32> to vector<8x128xbf16>
    %cst_22 = arith.constant dense<0.000000e+00> : vector<8x384xf32>
    %81 = tpu.matmul %80, %0, %cst_22 {dimension_numbers = #tpu.dot_dimension_numbers<[1], [0], [0], [1], [0, 0, 1, 1], [], []>} : vector<8x128xbf16>, vector<128x384xbf16>, vector<8x384xf32> -> vector<8x384xf32>
    %82 = vector.extract_strided_slice %79 {offsets = [0, 0], sizes = [8, 128], strides = [1, 1]} : vector<8x384xf32> to vector<8x128xf32>
    %83 = vector.extract_strided_slice %81 {offsets = [0, 0], sizes = [8, 128], strides = [1, 1]} : vector<8x384xf32> to vector<8x128xf32>
    %84 = arith.addf %82, %83 : vector<8x128xf32>
    %85 = arith.negf %84 : vector<8x128xf32>
    %86 = math.exp %85 : vector<8x128xf32>
    %cst_23 = arith.constant 1.000000e+00 : f32
    %87 = vector.broadcast %cst_23 : f32 to vector<8x128xf32>
    %88 = arith.addf %87, %86 : vector<8x128xf32>
    %89 = arith.divf %87, %88 : vector<8x128xf32>
    %90 = vector.extract_strided_slice %79 {offsets = [0, 128], sizes = [8, 128], strides = [1, 1]} : vector<8x384xf32> to vector<8x128xf32>
    %91 = vector.extract_strided_slice %81 {offsets = [0, 128], sizes = [8, 128], strides = [1, 1]} : vector<8x384xf32> to vector<8x128xf32>
    %92 = arith.addf %90, %91 : vector<8x128xf32>
    %93 = arith.negf %92 : vector<8x128xf32>
    %94 = math.exp %93 : vector<8x128xf32>
    %cst_24 = arith.constant 1.000000e+00 : f32
    %95 = vector.broadcast %cst_24 : f32 to vector<8x128xf32>
    %96 = arith.addf %95, %94 : vector<8x128xf32>
    %97 = arith.divf %95, %96 : vector<8x128xf32>
    %98 = vector.extract_strided_slice %79 {offsets = [0, 256], sizes = [8, 128], strides = [1, 1]} : vector<8x384xf32> to vector<8x128xf32>
    %99 = vector.extract_strided_slice %81 {offsets = [0, 256], sizes = [8, 128], strides = [1, 1]} : vector<8x384xf32> to vector<8x128xf32>
    %100 = arith.addf %99, %3 : vector<8x128xf32>
    %101 = arith.mulf %89, %100 : vector<8x128xf32>
    %102 = arith.addf %98, %101 : vector<8x128xf32>
    %103 = math.tanh %102 : vector<8x128xf32>
    %cst_25 = arith.constant 1.000000e+00 : f32
    %104 = vector.broadcast %cst_25 : f32 to vector<8x128xf32>
    %105 = arith.subf %104, %97 : vector<8x128xf32>
    %106 = arith.mulf %105, %103 : vector<8x128xf32>
    %107 = arith.mulf %97, %72 : vector<8x128xf32>
    %108 = arith.addf %106, %107 : vector<8x128xf32>
    %109 = arith.index_cast %c2_i32 : i32 to index
    %c0_26 = arith.constant 0 : index
    %c0_27 = arith.constant 0 : index
    %110 = vector.load %arg4[%109, %c0_26, %c0_27] : memref<8x8x128xf32, #tpu.memory_space<vmem>>, vector<1x8x128xf32>
    %111 = vector.shape_cast %110 : vector<1x8x128xf32> to vector<8x128xf32>
    %112 = vector.shape_cast %108 : vector<8x128xf32> to vector<1x8x128xf32>
    tpu.vector_store %arg4[%109, %c0_26, %c0_27], %112 {strides = array<i32>} : memref<8x8x128xf32, #tpu.memory_space<vmem>>, vector<1x8x128xf32>,
    %c3_i32 = arith.constant 3 : i32
    %113 = arith.index_cast %c3_i32 : i32 to index
    %c0_28 = arith.constant 0 : index
    %c0_29 = arith.constant 0 : index
    %114 = vector.load %arg0[%113, %c0_28, %c0_29] : memref<8x8x384xf32, #tpu.memory_space<vmem>>, vector<1x8x384xf32>
    %115 = vector.shape_cast %114 : vector<1x8x384xf32> to vector<8x384xf32>
    %116 = arith.truncf %108 : vector<8x128xf32> to vector<8x128xbf16>
    %cst_30 = arith.constant dense<0.000000e+00> : vector<8x384xf32>
    %117 = tpu.matmul %116, %0, %cst_30 {dimension_numbers = #tpu.dot_dimension_numbers<[1], [0], [0], [1], [0, 0, 1, 1], [], []>} : vector<8x128xbf16>, vector<128x384xbf16>, vector<8x384xf32> -> vector<8x384xf32>
    %118 = vector.extract_strided_slice %115 {offsets = [0, 0], sizes = [8, 128], strides = [1, 1]} : vector<8x384xf32> to vector<8x128xf32>
    %119 = vector.extract_strided_slice %117 {offsets = [0, 0], sizes = [8, 128], strides = [1, 1]} : vector<8x384xf32> to vector<8x128xf32>
    %120 = arith.addf %118, %119 : vector<8x128xf32>
    %121 = arith.negf %120 : vector<8x128xf32>
    %122 = math.exp %121 : vector<8x128xf32>
    %cst_31 = arith.constant 1.000000e+00 : f32
    %123 = vector.broadcast %cst_31 : f32 to vector<8x128xf32>
    %124 = arith.addf %123, %122 : vector<8x128xf32>
    %125 = arith.divf %123, %124 : vector<8x128xf32>
    %126 = vector.extract_strided_slice %115 {offsets = [0, 128], sizes = [8, 128], strides = [1, 1]} : vector<8x384xf32> to vector<8x128xf32>
    %127 = vector.extract_strided_slice %117 {offsets = [0, 128], sizes = [8, 128], strides = [1, 1]} : vector<8x384xf32> to vector<8x128xf32>
    %128 = arith.addf %126, %127 : vector<8x128xf32>
    %129 = arith.negf %128 : vector<8x128xf32>
    %130 = math.exp %129 : vector<8x128xf32>
    %cst_32 = arith.constant 1.000000e+00 : f32
    %131 = vector.broadcast %cst_32 : f32 to vector<8x128xf32>
    %132 = arith.addf %131, %130 : vector<8x128xf32>
    %133 = arith.divf %131, %132 : vector<8x128xf32>
    %134 = vector.extract_strided_slice %115 {offsets = [0, 256], sizes = [8, 128], strides = [1, 1]} : vector<8x384xf32> to vector<8x128xf32>
    %135 = vector.extract_strided_slice %117 {offsets = [0, 256], sizes = [8, 128], strides = [1, 1]} : vector<8x384xf32> to vector<8x128xf32>
    %136 = arith.addf %135, %3 : vector<8x128xf32>
    %137 = arith.mulf %125, %136 : vector<8x128xf32>
    %138 = arith.addf %134, %137 : vector<8x128xf32>
    %139 = math.tanh %138 : vector<8x128xf32>
    %cst_33 = arith.constant 1.000000e+00 : f32
    %140 = vector.broadcast %cst_33 : f32 to vector<8x128xf32>
    %141 = arith.subf %140, %133 : vector<8x128xf32>
    %142 = arith.mulf %141, %139 : vector<8x128xf32>
    %143 = arith.mulf %133, %108 : vector<8x128xf32>
    %144 = arith.addf %142, %143 : vector<8x128xf32>
    %145 = arith.index_cast %c3_i32 : i32 to index
    %c0_34 = arith.constant 0 : index
    %c0_35 = arith.constant 0 : index
    %146 = vector.load %arg4[%145, %c0_34, %c0_35] : memref<8x8x128xf32, #tpu.memory_space<vmem>>, vector<1x8x128xf32>
    %147 = vector.shape_cast %146 : vector<1x8x128xf32> to vector<8x128xf32>
    %148 = vector.shape_cast %144 : vector<8x128xf32> to vector<1x8x128xf32>
    tpu.vector_store %arg4[%145, %c0_34, %c0_35], %148 {strides = array<i32>} : memref<8x8x128xf32, #tpu.memory_space<vmem>>, vector<1x8x128xf32>,
    %c4_i32 = arith.constant 4 : i32
    %149 = arith.index_cast %c4_i32 : i32 to index
    %c0_36 = arith.constant 0 : index
    %c0_37 = arith.constant 0 : index
    %150 = vector.load %arg0[%149, %c0_36, %c0_37] : memref<8x8x384xf32, #tpu.memory_space<vmem>>, vector<1x8x384xf32>
    %151 = vector.shape_cast %150 : vector<1x8x384xf32> to vector<8x384xf32>
    %152 = arith.truncf %144 : vector<8x128xf32> to vector<8x128xbf16>
    %cst_38 = arith.constant dense<0.000000e+00> : vector<8x384xf32>
    %153 = tpu.matmul %152, %0, %cst_38 {dimension_numbers = #tpu.dot_dimension_numbers<[1], [0], [0], [1], [0, 0, 1, 1], [], []>} : vector<8x128xbf16>, vector<128x384xbf16>, vector<8x384xf32> -> vector<8x384xf32>
    %154 = vector.extract_strided_slice %151 {offsets = [0, 0], sizes = [8, 128], strides = [1, 1]} : vector<8x384xf32> to vector<8x128xf32>
    %155 = vector.extract_strided_slice %153 {offsets = [0, 0], sizes = [8, 128], strides = [1, 1]} : vector<8x384xf32> to vector<8x128xf32>
    %156 = arith.addf %154, %155 : vector<8x128xf32>
    %157 = arith.negf %156 : vector<8x128xf32>
    %158 = math.exp %157 : vector<8x128xf32>
    %cst_39 = arith.constant 1.000000e+00 : f32
    %159 = vector.broadcast %cst_39 : f32 to vector<8x128xf32>
    %160 = arith.addf %159, %158 : vector<8x128xf32>
    %161 = arith.divf %159, %160 : vector<8x128xf32>
    %162 = vector.extract_strided_slice %151 {offsets = [0, 128], sizes = [8, 128], strides = [1, 1]} : vector<8x384xf32> to vector<8x128xf32>
    %163 = vector.extract_strided_slice %153 {offsets = [0, 128], sizes = [8, 128], strides = [1, 1]} : vector<8x384xf32> to vector<8x128xf32>
    %164 = arith.addf %162, %163 : vector<8x128xf32>
    %165 = arith.negf %164 : vector<8x128xf32>
    %166 = math.exp %165 : vector<8x128xf32>
    %cst_40 = arith.constant 1.000000e+00 : f32
    %167 = vector.broadcast %cst_40 : f32 to vector<8x128xf32>
    %168 = arith.addf %167, %166 : vector<8x128xf32>
    %169 = arith.divf %167, %168 : vector<8x128xf32>
    %170 = vector.extract_strided_slice %151 {offsets = [0, 256], sizes = [8, 128], strides = [1, 1]} : vector<8x384xf32> to vector<8x128xf32>
    %171 = vector.extract_strided_slice %153 {offsets = [0, 256], sizes = [8, 128], strides = [1, 1]} : vector<8x384xf32> to vector<8x128xf32>
    %172 = arith.addf %171, %3 : vector<8x128xf32>
    %173 = arith.mulf %161, %172 : vector<8x128xf32>
    %174 = arith.addf %170, %173 : vector<8x128xf32>
    %175 = math.tanh %174 : vector<8x128xf32>
    %cst_41 = arith.constant 1.000000e+00 : f32
    %176 = vector.broadcast %cst_41 : f32 to vector<8x128xf32>
    %177 = arith.subf %176, %169 : vector<8x128xf32>
    %178 = arith.mulf %177, %175 : vector<8x128xf32>
    %179 = arith.mulf %169, %144 : vector<8x128xf32>
    %180 = arith.addf %178, %179 : vector<8x128xf32>
    %181 = arith.index_cast %c4_i32 : i32 to index
    %c0_42 = arith.constant 0 : index
    %c0_43 = arith.constant 0 : index
    %182 = vector.load %arg4[%181, %c0_42, %c0_43] : memref<8x8x128xf32, #tpu.memory_space<vmem>>, vector<1x8x128xf32>
    %183 = vector.shape_cast %182 : vector<1x8x128xf32> to vector<8x128xf32>
    %184 = vector.shape_cast %180 : vector<8x128xf32> to vector<1x8x128xf32>
    tpu.vector_store %arg4[%181, %c0_42, %c0_43], %184 {strides = array<i32>} : memref<8x8x128xf32, #tpu.memory_space<vmem>>, vector<1x8x128xf32>,
    %c5_i32 = arith.constant 5 : i32
    %185 = arith.index_cast %c5_i32 : i32 to index
    %c0_44 = arith.constant 0 : index
    %c0_45 = arith.constant 0 : index
    %186 = vector.load %arg0[%185, %c0_44, %c0_45] : memref<8x8x384xf32, #tpu.memory_space<vmem>>, vector<1x8x384xf32>
    %187 = vector.shape_cast %186 : vector<1x8x384xf32> to vector<8x384xf32>
    %188 = arith.truncf %180 : vector<8x128xf32> to vector<8x128xbf16>
    %cst_46 = arith.constant dense<0.000000e+00> : vector<8x384xf32>
    %189 = tpu.matmul %188, %0, %cst_46 {dimension_numbers = #tpu.dot_dimension_numbers<[1], [0], [0], [1], [0, 0, 1, 1], [], []>} : vector<8x128xbf16>, vector<128x384xbf16>, vector<8x384xf32> -> vector<8x384xf32>
    %190 = vector.extract_strided_slice %187 {offsets = [0, 0], sizes = [8, 128], strides = [1, 1]} : vector<8x384xf32> to vector<8x128xf32>
    %191 = vector.extract_strided_slice %189 {offsets = [0, 0], sizes = [8, 128], strides = [1, 1]} : vector<8x384xf32> to vector<8x128xf32>
    %192 = arith.addf %190, %191 : vector<8x128xf32>
    %193 = arith.negf %192 : vector<8x128xf32>
    %194 = math.exp %193 : vector<8x128xf32>
    %cst_47 = arith.constant 1.000000e+00 : f32
    %195 = vector.broadcast %cst_47 : f32 to vector<8x128xf32>
    %196 = arith.addf %195, %194 : vector<8x128xf32>
    %197 = arith.divf %195, %196 : vector<8x128xf32>
    %198 = vector.extract_strided_slice %187 {offsets = [0, 128], sizes = [8, 128], strides = [1, 1]} : vector<8x384xf32> to vector<8x128xf32>
    %199 = vector.extract_strided_slice %189 {offsets = [0, 128], sizes = [8, 128], strides = [1, 1]} : vector<8x384xf32> to vector<8x128xf32>
    %200 = arith.addf %198, %199 : vector<8x128xf32>
    %201 = arith.negf %200 : vector<8x128xf32>
    %202 = math.exp %201 : vector<8x128xf32>
    %cst_48 = arith.constant 1.000000e+00 : f32
    %203 = vector.broadcast %cst_48 : f32 to vector<8x128xf32>
    %204 = arith.addf %203, %202 : vector<8x128xf32>
    %205 = arith.divf %203, %204 : vector<8x128xf32>
    %206 = vector.extract_strided_slice %187 {offsets = [0, 256], sizes = [8, 128], strides = [1, 1]} : vector<8x384xf32> to vector<8x128xf32>
    %207 = vector.extract_strided_slice %189 {offsets = [0, 256], sizes = [8, 128], strides = [1, 1]} : vector<8x384xf32> to vector<8x128xf32>
    %208 = arith.addf %207, %3 : vector<8x128xf32>
    %209 = arith.mulf %197, %208 : vector<8x128xf32>
    %210 = arith.addf %206, %209 : vector<8x128xf32>
    %211 = math.tanh %210 : vector<8x128xf32>
    %cst_49 = arith.constant 1.000000e+00 : f32
    %212 = vector.broadcast %cst_49 : f32 to vector<8x128xf32>
    %213 = arith.subf %212, %205 : vector<8x128xf32>
    %214 = arith.mulf %213, %211 : vector<8x128xf32>
    %215 = arith.mulf %205, %180 : vector<8x128xf32>
    %216 = arith.addf %214, %215 : vector<8x128xf32>
    %217 = arith.index_cast %c5_i32 : i32 to index
    %c0_50 = arith.constant 0 : index
    %c0_51 = arith.constant 0 : index
    %218 = vector.load %arg4[%217, %c0_50, %c0_51] : memref<8x8x128xf32, #tpu.memory_space<vmem>>, vector<1x8x128xf32>
    %219 = vector.shape_cast %218 : vector<1x8x128xf32> to vector<8x128xf32>
    %220 = vector.shape_cast %216 : vector<8x128xf32> to vector<1x8x128xf32>
    tpu.vector_store %arg4[%217, %c0_50, %c0_51], %220 {strides = array<i32>} : memref<8x8x128xf32, #tpu.memory_space<vmem>>, vector<1x8x128xf32>,
    %c6_i32 = arith.constant 6 : i32
    %221 = arith.index_cast %c6_i32 : i32 to index
    %c0_52 = arith.constant 0 : index
    %c0_53 = arith.constant 0 : index
    %222 = vector.load %arg0[%221, %c0_52, %c0_53] : memref<8x8x384xf32, #tpu.memory_space<vmem>>, vector<1x8x384xf32>
    %223 = vector.shape_cast %222 : vector<1x8x384xf32> to vector<8x384xf32>
    %224 = arith.truncf %216 : vector<8x128xf32> to vector<8x128xbf16>
    %cst_54 = arith.constant dense<0.000000e+00> : vector<8x384xf32>
    %225 = tpu.matmul %224, %0, %cst_54 {dimension_numbers = #tpu.dot_dimension_numbers<[1], [0], [0], [1], [0, 0, 1, 1], [], []>} : vector<8x128xbf16>, vector<128x384xbf16>, vector<8x384xf32> -> vector<8x384xf32>
    %226 = vector.extract_strided_slice %223 {offsets = [0, 0], sizes = [8, 128], strides = [1, 1]} : vector<8x384xf32> to vector<8x128xf32>
    %227 = vector.extract_strided_slice %225 {offsets = [0, 0], sizes = [8, 128], strides = [1, 1]} : vector<8x384xf32> to vector<8x128xf32>
    %228 = arith.addf %226, %227 : vector<8x128xf32>
    %229 = arith.negf %228 : vector<8x128xf32>
    %230 = math.exp %229 : vector<8x128xf32>
    %cst_55 = arith.constant 1.000000e+00 : f32
    %231 = vector.broadcast %cst_55 : f32 to vector<8x128xf32>
    %232 = arith.addf %231, %230 : vector<8x128xf32>
    %233 = arith.divf %231, %232 : vector<8x128xf32>
    %234 = vector.extract_strided_slice %223 {offsets = [0, 128], sizes = [8, 128], strides = [1, 1]} : vector<8x384xf32> to vector<8x128xf32>
    %235 = vector.extract_strided_slice %225 {offsets = [0, 128], sizes = [8, 128], strides = [1, 1]} : vector<8x384xf32> to vector<8x128xf32>
    %236 = arith.addf %234, %235 : vector<8x128xf32>
    %237 = arith.negf %236 : vector<8x128xf32>
    %238 = math.exp %237 : vector<8x128xf32>
    %cst_56 = arith.constant 1.000000e+00 : f32
    %239 = vector.broadcast %cst_56 : f32 to vector<8x128xf32>
    %240 = arith.addf %239, %238 : vector<8x128xf32>
    %241 = arith.divf %239, %240 : vector<8x128xf32>
    %242 = vector.extract_strided_slice %223 {offsets = [0, 256], sizes = [8, 128], strides = [1, 1]} : vector<8x384xf32> to vector<8x128xf32>
    %243 = vector.extract_strided_slice %225 {offsets = [0, 256], sizes = [8, 128], strides = [1, 1]} : vector<8x384xf32> to vector<8x128xf32>
    %244 = arith.addf %243, %3 : vector<8x128xf32>
    %245 = arith.mulf %233, %244 : vector<8x128xf32>
    %246 = arith.addf %242, %245 : vector<8x128xf32>
    %247 = math.tanh %246 : vector<8x128xf32>
    %cst_57 = arith.constant 1.000000e+00 : f32
    %248 = vector.broadcast %cst_57 : f32 to vector<8x128xf32>
    %249 = arith.subf %248, %241 : vector<8x128xf32>
    %250 = arith.mulf %249, %247 : vector<8x128xf32>
    %251 = arith.mulf %241, %216 : vector<8x128xf32>
    %252 = arith.addf %250, %251 : vector<8x128xf32>
    %253 = arith.index_cast %c6_i32 : i32 to index
    %c0_58 = arith.constant 0 : index
    %c0_59 = arith.constant 0 : index
    %254 = vector.load %arg4[%253, %c0_58, %c0_59] : memref<8x8x128xf32, #tpu.memory_space<vmem>>, vector<1x8x128xf32>
    %255 = vector.shape_cast %254 : vector<1x8x128xf32> to vector<8x128xf32>
    %256 = vector.shape_cast %252 : vector<8x128xf32> to vector<1x8x128xf32>
    tpu.vector_store %arg4[%253, %c0_58, %c0_59], %256 {strides = array<i32>} : memref<8x8x128xf32, #tpu.memory_space<vmem>>, vector<1x8x128xf32>,
    %c7_i32 = arith.constant 7 : i32
    %257 = arith.index_cast %c7_i32 : i32 to index
    %c0_60 = arith.constant 0 : index
    %c0_61 = arith.constant 0 : index
    %258 = vector.load %arg0[%257, %c0_60, %c0_61] : memref<8x8x384xf32, #tpu.memory_space<vmem>>, vector<1x8x384xf32>
    %259 = vector.shape_cast %258 : vector<1x8x384xf32> to vector<8x384xf32>
    %260 = arith.truncf %252 : vector<8x128xf32> to vector<8x128xbf16>
    %cst_62 = arith.constant dense<0.000000e+00> : vector<8x384xf32>
    %261 = tpu.matmul %260, %0, %cst_62 {dimension_numbers = #tpu.dot_dimension_numbers<[1], [0], [0], [1], [0, 0, 1, 1], [], []>} : vector<8x128xbf16>, vector<128x384xbf16>, vector<8x384xf32> -> vector<8x384xf32>
    %262 = vector.extract_strided_slice %259 {offsets = [0, 0], sizes = [8, 128], strides = [1, 1]} : vector<8x384xf32> to vector<8x128xf32>
    %263 = vector.extract_strided_slice %261 {offsets = [0, 0], sizes = [8, 128], strides = [1, 1]} : vector<8x384xf32> to vector<8x128xf32>
    %264 = arith.addf %262, %263 : vector<8x128xf32>
    %265 = arith.negf %264 : vector<8x128xf32>
    %266 = math.exp %265 : vector<8x128xf32>
    %cst_63 = arith.constant 1.000000e+00 : f32
    %267 = vector.broadcast %cst_63 : f32 to vector<8x128xf32>
    %268 = arith.addf %267, %266 : vector<8x128xf32>
    %269 = arith.divf %267, %268 : vector<8x128xf32>
    %270 = vector.extract_strided_slice %259 {offsets = [0, 128], sizes = [8, 128], strides = [1, 1]} : vector<8x384xf32> to vector<8x128xf32>
    %271 = vector.extract_strided_slice %261 {offsets = [0, 128], sizes = [8, 128], strides = [1, 1]} : vector<8x384xf32> to vector<8x128xf32>
    %272 = arith.addf %270, %271 : vector<8x128xf32>
    %273 = arith.negf %272 : vector<8x128xf32>
    %274 = math.exp %273 : vector<8x128xf32>
    %cst_64 = arith.constant 1.000000e+00 : f32
    %275 = vector.broadcast %cst_64 : f32 to vector<8x128xf32>
    %276 = arith.addf %275, %274 : vector<8x128xf32>
    %277 = arith.divf %275, %276 : vector<8x128xf32>
    %278 = vector.extract_strided_slice %259 {offsets = [0, 256], sizes = [8, 128], strides = [1, 1]} : vector<8x384xf32> to vector<8x128xf32>
    %279 = vector.extract_strided_slice %261 {offsets = [0, 256], sizes = [8, 128], strides = [1, 1]} : vector<8x384xf32> to vector<8x128xf32>
    %280 = arith.addf %279, %3 : vector<8x128xf32>
    %281 = arith.mulf %269, %280 : vector<8x128xf32>
    %282 = arith.addf %278, %281 : vector<8x128xf32>
    %283 = math.tanh %282 : vector<8x128xf32>
    %cst_65 = arith.constant 1.000000e+00 : f32
    %284 = vector.broadcast %cst_65 : f32 to vector<8x128xf32>
    %285 = arith.subf %284, %277 : vector<8x128xf32>
    %286 = arith.mulf %285, %283 : vector<8x128xf32>
    %287 = arith.mulf %277, %252 : vector<8x128xf32>
    %288 = arith.addf %286, %287 : vector<8x128xf32>
    %289 = arith.index_cast %c7_i32 : i32 to index
    %c0_66 = arith.constant 0 : index
    %c0_67 = arith.constant 0 : index
    %290 = vector.load %arg4[%289, %c0_66, %c0_67] : memref<8x8x128xf32, #tpu.memory_space<vmem>>, vector<1x8x128xf32>
    %291 = vector.shape_cast %290 : vector<1x8x128xf32> to vector<8x128xf32>
    %292 = vector.shape_cast %288 : vector<8x128xf32> to vector<1x8x128xf32>
    tpu.vector_store %arg4[%289, %c0_66, %c0_67], %292 {strides = array<i32>} : memref<8x8x128xf32, #tpu.memory_space<vmem>>, vector<1x8x128xf32>,
    %c8_i32 = arith.constant 8 : i32
    return
  }
}

</mosaic_0001>

<llo_original>
// kernel: tpu_custom_call.1
$region0: #{tpu_custom_call.1}
  #allocation0 [shape = 'u32[]', space=smem, size = 0x4, offset = 0x4, fixed_abs, tag = 'smem constant byte address 0x4 - core index']
  #allocation1 [shape = 'u32[144,128]{1,0:T(1,128)}', space=vmem, size = 0x12000, scoped, tag = 'internal scratch']
  %s0 = inlined_call_operand.hbm [shape: f32[8,8,384], index: 0, kind: input, shape index: {}]
  %s1 = inlined_call_operand.hbm [shape: f32[8,128], index: 1, kind: input, shape index: {}]
  %s2 = inlined_call_operand.hbm [shape: bf16[128,384], index: 2, kind: input, shape index: {}]
  %s3 = inlined_call_operand.vmem [shape: f32[1,128], index: 3, kind: input, shape index: {}]
  %s4 = inlined_call_operand.hbm [shape: f32[8,8,128], index: 4, kind: output, shape index: {}]
  %s5 = sld [smem:[#allocation0]]
  $region38: #{tpu_custom_call.1} parent=0
    _
  %s7 = ssub.s32 1, %s5
  %s8 = scalar_select 0, %s7, %s5
  $region1: #{tpu_custom_call.1} parent=0
    #allocation2 [shape = 'u8[98304]{0}', space=vmem, size = 0x18000, scoped, tag = 'input window, operand 0, single buffered']
    #allocation3 [shape = 's32[1]{0}', space=sflag, size = 0x4, scoped, tag = 'scoped memory for tpu_custom_call.1']
    #allocation4 [shape = 's32[1]{0}', space=sflag, size = 0x4, scoped, tag = 'scoped memory for tpu_custom_call.1']
    #allocation5 [shape = 'u8[4096]{0}', space=vmem, size = 0x1000, scoped, tag = 'input window, operand 1, single buffered']
    #allocation6 [shape = 's32[1]{0}', space=sflag, size = 0x4, scoped, tag = 'scoped memory for tpu_custom_call.1']
    #allocation7 [shape = 'u8[98304]{0}', space=vmem, size = 0x18000, scoped, tag = 'input window, operand 2, single buffered']
    #allocation8 [shape = 'u8[32768]{0}', space=vmem, size = 0x8000, scoped, tag = 'output window, operand 0, single buffered']
    %9 = vsyncpa [#allocation3], 0
    %10 = vsyncpa [#allocation6], 0
    %11 = vsyncpa [#allocation4], 0
    // Predicated region
    $region2: #{tpu_custom_call.1} parent=1 // pred_check
      _
    $region3: #{tpu_custom_call.1} parent=1 // pred_check_branch
      %13 = sbr.rel (0) target = $region5
    $region4: #{tpu_custom_call.1} parent=1 // pred_region
      %s15 = ssub.s32 3072, 3072
      %16 = vsyncadd [#allocation3], %s15
      %s17 = sshll.u32 [#allocation2], 4
      %s18 = int_to_ptr.vmem [resolvable:$true] %s17
      %23 = dma.hbm_to_vmem [thread:$0]  %s0, 3072, %s18, [#allocation3], 384, 384, 24
    $region5: #{tpu_custom_call.1} parent=1 // pred_fallthru
      _
    // Predicated region
    $region6: #{tpu_custom_call.1} parent=1 // pred_check
      _
    $region7: #{tpu_custom_call.1} parent=1 // pred_check_branch
      %25 = sbr.rel (0) target = $region9
    $region8: #{tpu_custom_call.1} parent=1 // pred_region
      %s27 = ssub.s32 128, 128
      %28 = vsyncadd [#allocation6], %s27
      %s30 = sshll.u32 [#allocation5], 4
      %s31 = int_to_ptr.vmem [resolvable:$true] %s30
      %33 = dma.hbm_to_vmem [thread:$0]  %s1, 128, %s31, [#allocation6]
    $region9: #{tpu_custom_call.1} parent=1 // pred_fallthru
      _
    // Predicated region
    $region10: #{tpu_custom_call.1} parent=1 // pred_check
      _
    $region11: #{tpu_custom_call.1} parent=1 // pred_check_branch
      %35 = sbr.rel (0) target = $region13
    $region12: #{tpu_custom_call.1} parent=1 // pred_region
      %s37 = ssub.s32 3072, 3072
      %38 = vsyncadd [#allocation6], %s37
      %s39 = sshll.u32 [#allocation7], 4
      %s40 = int_to_ptr.vmem [resolvable:$true] %s39
      %45 = dma.hbm_to_vmem [thread:$0]  %s2, 3072, %s40, [#allocation6], 192, 192, 12
    $region13: #{tpu_custom_call.1} parent=1 // pred_fallthru
      _
    // Predicated region
    $region14: #{tpu_custom_call.1} parent=1 // pred_check
      _
    $region15: #{tpu_custom_call.1} parent=1 // pred_check_branch
      %47 = sbr.rel (0) target = $region17
    $region16: #{tpu_custom_call.1} parent=1 // pred_region
      _
    $region17: #{tpu_custom_call.1} parent=1 // pred_fallthru
      _
    // Predicated region
    $region18: #{tpu_custom_call.1} parent=1 // pred_check
      _
    $region19: #{tpu_custom_call.1} parent=1 // pred_check_branch
      %49 = sbr.rel (0) target = $region21
    $region20: #{tpu_custom_call.1} parent=1 // pred_region
      %50 = dma.done [#allocation3], 3072
    $region21: #{tpu_custom_call.1} parent=1 // pred_fallthru
      _
    // Predicated region
    $region22: #{tpu_custom_call.1} parent=1 // pred_check
      _
    $region23: #{tpu_custom_call.1} parent=1 // pred_check_branch
      %52 = sbr.rel (0) target = $region25
    $region24: #{tpu_custom_call.1} parent=1 // pred_region
      %53 = dma.done [#allocation6], 128
    $region25: #{tpu_custom_call.1} parent=1 // pred_fallthru
      _
    // Predicated region
    $region26: #{tpu_custom_call.1} parent=1 // pred_check
      _
    $region27: #{tpu_custom_call.1} parent=1 // pred_check_branch
      %55 = sbr.rel (0) target = $region29
    $region28: #{tpu_custom_call.1} parent=1 // pred_region
      %56 = dma.done [#allocation6], 3072
    $region29: #{tpu_custom_call.1} parent=1 // pred_fallthru
      _
    %v58 = vld [vmem:[#allocation7] sm:$0xff]
    %v59 = vld [vmem:[#allocation7 + $0x8] sm:$0xf]
    %v60 = vld [vmem:[#allocation7 + $0xc] sm:$0xff]
    %v61 = vld [vmem:[#allocation7 + $0x14] sm:$0xf]
    %v62 = vld [vmem:[#allocation7 + $0x18] sm:$0xff]
    %v63 = vld [vmem:[#allocation7 + $0x20] sm:$0xf]
    %v64 = vld [vmem:[#allocation7 + $0x24] sm:$0xff]
    %v65 = vld [vmem:[#allocation7 + $0x2c] sm:$0xf]
    %v66 = vld [vmem:[#allocation7 + $0x30] sm:$0xff]
    %v67 = vld [vmem:[#allocation7 + $0x38] sm:$0xf]
    %v68 = vld [vmem:[#allocation7 + $0x3c] sm:$0xff]
    %v69 = vld [vmem:[#allocation7 + $0x44] sm:$0xf]
    %v70 = vld [vmem:[#allocation7 + $0x48] sm:$0xff]
    %v71 = vld [vmem:[#allocation7 + $0x50] sm:$0xf]
    %v72 = vld [vmem:[#allocation7 + $0x54] sm:$0xff]
    %v73 = vld [vmem:[#allocation7 + $0x5c] sm:$0xf]
    %v74 = vld [vmem:[#allocation7 + $0x60] sm:$0xff]
    %v75 = vld [vmem:[#allocation7 + $0x68] sm:$0xf]
    %v76 = vld [vmem:[#allocation7 + $0x6c] sm:$0xff]
    %v77 = vld [vmem:[#allocation7 + $0x74] sm:$0xf]
    %v78 = vld [vmem:[#allocation7 + $0x78] sm:$0xff]
    %v79 = vld [vmem:[#allocation7 + $0x80] sm:$0xf]
    %v80 = vld [vmem:[#allocation7 + $0x84] sm:$0xff]
    %v81 = vld [vmem:[#allocation7 + $0x8c] sm:$0xf]
    %v82 = vld [vmem:[#allocation7 + $0x90] sm:$0xff]
    %v83 = vld [vmem:[#allocation7 + $0x98] sm:$0xf]
    %v84 = vld [vmem:[#allocation7 + $0x9c] sm:$0xff]
    %v85 = vld [vmem:[#allocation7 + $0xa4] sm:$0xf]
    %v86 = vld [vmem:[#allocation7 + $0xa8] sm:$0xff]
    %v87 = vld [vmem:[#allocation7 + $0xb0] sm:$0xf]
    %v88 = vld [vmem:[#allocation7 + $0xb4] sm:$0xff]
    %v89 = vld [vmem:[#allocation7 + $0xbc] sm:$0xf]
    %v90 = vld [vmem:[%s3] sm:$0x1]
    %v92 = vlaneseq
    %v93 = vshrl.u32 %v92, 7
    %v94 = vsub.s32 0, %v93
    %v95 = vrot.slane %v90, %v94
    %v97 = vld [vmem:[#allocation5] sm:$0xff]
    %v98 = vld [vmem:[#allocation2] sm:$0xff]
    %v99 = vld [vmem:[#allocation2 + $0x8] sm:$0xff]
    %v100 = vld [vmem:[#allocation2 + $0x10] sm:$0xff]
    %v101 = vpack.c.bf16 %v97, %v97
    %v134 = vunpack.c.l.b16 %v58
    %v135 = vunpack.c.h.b16 %v58
    %v136 = vunpack.c.l.b16 %v59
    %v137 = vunpack.c.l.b16 %v60
    %v138 = vunpack.c.h.b16 %v60
    %v139 = vunpack.c.l.b16 %v61
    %v140 = vunpack.c.l.b16 %v62
    %v141 = vunpack.c.h.b16 %v62
    %v142 = vunpack.c.l.b16 %v63
    %v143 = vunpack.c.l.b16 %v64
    %v144 = vunpack.c.h.b16 %v64
    %v145 = vunpack.c.l.b16 %v65
    %v146 = vunpack.c.l.b16 %v66
    %v147 = vunpack.c.h.b16 %v66
    %v148 = vunpack.c.l.b16 %v67
    %v149 = vunpack.c.l.b16 %v68
    %v150 = vunpack.c.h.b16 %v68
    %v151 = vunpack.c.l.b16 %v69
    %v152 = vunpack.c.l.b16 %v70
    %v153 = vunpack.c.h.b16 %v70
    %v154 = vunpack.c.l.b16 %v71
    %v155 = vunpack.c.l.b16 %v72
    %v156 = vunpack.c.h.b16 %v72
    %v157 = vunpack.c.l.b16 %v73
    %v158 = vunpack.c.l.b16 %v74
    %v159 = vunpack.c.h.b16 %v74
    %v160 = vunpack.c.l.b16 %v75
    %v161 = vunpack.c.l.b16 %v76
    %v162 = vunpack.c.h.b16 %v76
    %v163 = vunpack.c.l.b16 %v77
    %v164 = vunpack.c.l.b16 %v78
    %v165 = vunpack.c.h.b16 %v78
    %v166 = vunpack.c.l.b16 %v79
    %v167 = vunpack.c.l.b16 %v80
    %v168 = vunpack.c.h.b16 %v80
    %v169 = vunpack.c.l.b16 %v81
    %v170 = vunpack.c.l.b16 %v82
    %v171 = vunpack.c.h.b16 %v82
    %v172 = vunpack.c.l.b16 %v83
    %v173 = vunpack.c.l.b16 %v84
    %v174 = vunpack.c.h.b16 %v84
    %v175 = vunpack.c.l.b16 %v85
    %v176 = vunpack.c.l.b16 %v86
    %v177 = vunpack.c.h.b16 %v86
    %v178 = vunpack.c.l.b16 %v87
    %v179 = vunpack.c.l.b16 %v88
    %v180 = vunpack.c.h.b16 %v88
    %v181 = vunpack.c.l.b16 %v89
    %v182 = vpack.c.b16 %v137, %v134
    %v183 = vpack.c.b16 %v138, %v135
    %v184 = vpack.c.b16 %v139, %v136
    %v185 = vpack.c.b16 %v143, %v140
    %v186 = vpack.c.b16 %v144, %v141
    %v187 = vpack.c.b16 %v145, %v142
    %v188 = vpack.c.b16 %v149, %v146
    %v189 = vpack.c.b16 %v150, %v147
    %v190 = vpack.c.b16 %v151, %v148
    %v191 = vpack.c.b16 %v155, %v152
    %v192 = vpack.c.b16 %v156, %v153
    %v193 = vpack.c.b16 %v157, %v154
    %v194 = vpack.c.b16 %v161, %v158
    %v195 = vpack.c.b16 %v162, %v159
    %v196 = vpack.c.b16 %v163, %v160
    %v197 = vpack.c.b16 %v167, %v164
    %v198 = vpack.c.b16 %v168, %v165
    %v199 = vpack.c.b16 %v169, %v166
    %v200 = vpack.c.b16 %v173, %v170
    %v201 = vpack.c.b16 %v174, %v171
    %v202 = vpack.c.b16 %v175, %v172
    %v203 = vpack.c.b16 %v179, %v176
    %v204 = vpack.c.b16 %v180, %v177
    %v205 = vpack.c.b16 %v181, %v178
    %230 = vmatprep.subr.bf16.mxu0 %v183
    %231 = vmatpush1.bf16.msra.mxu0 %v182
    %232 = vmatprep.subr.bf16.mxu0 %v186
    %233 = vmatpush1.bf16.msra.mxu0 %v185
    %234 = vmatprep.subr.bf16.mxu0 %v189
    %235 = vmatpush1.bf16.msra.mxu0 %v188
    %236 = vmatprep.subr.bf16.mxu0 %v192
    %237 = vmatpush1.bf16.msra.mxu0 %v191
    %238 = vmatprep.subr.bf16.mxu0 %v195
    %239 = vmatpush1.bf16.msra.mxu0 %v194
    %240 = vmatprep.subr.bf16.mxu0 %v198
    %241 = vmatpush1.bf16.msra.mxu0 %v197
    %242 = vmatprep.subr.bf16.mxu0 %v201
    %243 = vmatpush1.bf16.msra.mxu0 %v200
    %244 = vmatprep.subr.bf16.mxu0 %v204
    %245 = vmatpush1.bf16.msra.mxu0 %v203
    %246 = vmatprep.subr.bf16.mxu0 0
    %247 = vmatpush1.bf16.msra.mxu0 0
    %248 = vmatprep.subr.bf16.mxu0 0
    %249 = vmatpush1.bf16.msra.mxu0 0
    %250 = vmatprep.subr.bf16.mxu0 0
    %251 = vmatpush1.bf16.msra.mxu0 0
    %252 = vmatprep.subr.bf16.mxu0 0
    %253 = vmatpush1.bf16.msra.mxu0 0
    %254 = vmatprep.subr.bf16.mxu0 0
    %255 = vmatpush1.bf16.msra.mxu0 0
    %256 = vmatprep.subr.bf16.mxu0 0
    %257 = vmatpush1.bf16.msra.mxu0 0
    %258 = vmatprep.subr.bf16.mxu0 0
    %259 = vmatpush1.bf16.msra.mxu0 0
    %260 = vmatprep.subr.bf16.mxu0 0
    %261 = vmatpush1.bf16.msra.mxu0 0
    %262 = vmatprep.mubr.bf16.mxu0 0
    %263 = vmatmul.mubr.bf16.gmra.mrb[0].mxu0 %v101
    %v264 = vpop.f32.mrb[0].mxu0
    %v265 = vadd.f32 0.0, %v264
    %v266 = vpop.f32.mrb[0].mxu0
    %v267 = vadd.f32 0.0, %v266
    %v268 = vpop.f32.mrb[0].mxu0
    %v269 = vpop.f32.mrb[0].mxu0
    %270 = vdwg.mxu0
    %271 = vmatprep.subr.bf16.mxu0 0
    %272 = vmatpush1.bf16.msra.mxu0 %v184
    %273 = vmatprep.subr.bf16.mxu0 0
    %274 = vmatpush1.bf16.msra.mxu0 %v187
    %275 = vmatprep.subr.bf16.mxu0 0
    %276 = vmatpush1.bf16.msra.mxu0 %v190
    %277 = vmatprep.subr.bf16.mxu0 0
    %278 = vmatpush1.bf16.msra.mxu0 %v193
    %279 = vmatprep.subr.bf16.mxu0 0
    %280 = vmatpush1.bf16.msra.mxu0 %v196
    %281 = vmatprep.subr.bf16.mxu0 0
    %282 = vmatpush1.bf16.msra.mxu0 %v199
    %283 = vmatprep.subr.bf16.mxu0 0
    %284 = vmatpush1.bf16.msra.mxu0 %v202
    %285 = vmatprep.subr.bf16.mxu0 0
    %286 = vmatpush1.bf16.msra.mxu0 %v205
    %287 = vmatprep.subr.bf16.mxu0 0
    %288 = vmatpush1.bf16.msra.mxu0 0
    %289 = vmatprep.subr.bf16.mxu0 0
    %290 = vmatpush1.bf16.msra.mxu0 0
    %291 = vmatprep.subr.bf16.mxu0 0
    %292 = vmatpush1.bf16.msra.mxu0 0
    %293 = vmatprep.subr.bf16.mxu0 0
    %294 = vmatpush1.bf16.msra.mxu0 0
    %295 = vmatprep.subr.bf16.mxu0 0
    %296 = vmatpush1.bf16.msra.mxu0 0
    %297 = vmatprep.subr.bf16.mxu0 0
    %298 = vmatpush1.bf16.msra.mxu0 0
    %299 = vmatprep.subr.bf16.mxu0 0
    %300 = vmatpush1.bf16.msra.mxu0 0
    %301 = vmatprep.subr.bf16.mxu0 0
    %302 = vmatpush1.bf16.msra.mxu0 0
    %303 = vmatprep.mubr.bf16.mxu0 0
    %304 = vmatmul.mubr.bf16.gmra.mrb[0].mxu0 %v101
    %v305 = vpop.f32.mrb[0].mxu0
    %v306 = vadd.f32 0.0, %v305
    %v307 = vpop.f32.mrb[0].mxu0
    %v308 = vpop.f32.mrb[0].mxu0
    %v309 = vpop.f32.mrb[0].mxu0
    %310 = vdwg.mxu0
    %v311 = vadd.f32 %v98, %v265
    %v312 = vxor.u32 %v311, 2147483648
    %v313 = vmul.f32 %v312, 1.442695
    %v314 = vpow.pop %v313
    %v315 = vadd.f32 %v314, 1.0
    %v316 = vrcp.pop %v315
    %v317 = vmul.f32 1.0, %v316
    %v318 = vadd.f32 %v99, %v267
    %v319 = vxor.u32 %v318, 2147483648
    %v320 = vmul.f32 %v319, 1.442695
    %v321 = vpow.pop %v320
    %v322 = vadd.f32 %v321, 1.0
    %v323 = vrcp.pop %v322
    %v324 = vmul.f32 1.0, %v323
    %v325 = vadd.f32 %v306, %v95
    %v326 = vmul.f32 %v317, %v325
    %v327 = vadd.f32 %v100, %v326
    %v328 = vtanh.pop %v327
    %v329 = vsub.f32 1.0, %v324
    %v330 = vmul.f32 %v329, %v328
    %v331 = vmul.f32 %v324, %v97
    %v332 = vadd.f32 %v330, %v331
    %333 = vst [vmem:[#allocation8] sm:$0xff] %v332
    %s334 = scalar_lea.vmem [#allocation2], 24
    %v335 = vld [vmem:[%s334] sm:$0xff]
    %v336 = vld [vmem:[%s334 + $0x8] sm:$0xff]
    %v337 = vld [vmem:[%s334 + $0x10] sm:$0xff]
    %v338 = vpack.c.bf16 %v332, %v332
    %339 = vmatprep.subr.bf16.mxu0 %v183
    %340 = vmatpush1.bf16.msra.mxu0 %v182
    %341 = vmatprep.subr.bf16.mxu0 %v186
    %342 = vmatpush1.bf16.msra.mxu0 %v185
    %343 = vmatprep.subr.bf16.mxu0 %v189
    %344 = vmatpush1.bf16.msra.mxu0 %v188
    %345 = vmatprep.subr.bf16.mxu0 %v192
    %346 = vmatpush1.bf16.msra.mxu0 %v191
    %347 = vmatprep.subr.bf16.mxu0 %v195
    %348 = vmatpush1.bf16.msra.mxu0 %v194
    %349 = vmatprep.subr.bf16.mxu0 %v198
    %350 = vmatpush1.bf16.msra.mxu0 %v197
    %351 = vmatprep.subr.bf16.mxu0 %v201
    %352 = vmatpush1.bf16.msra.mxu0 %v200
    %353 = vmatprep.subr.bf16.mxu0 %v204
    %354 = vmatpush1.bf16.msra.mxu0 %v203
    %355 = vmatprep.subr.bf16.mxu0 0
    %356 = vmatpush1.bf16.msra.mxu0 0
    %357 = vmatprep.subr.bf16.mxu0 0
    %358 = vmatpush1.bf16.msra.mxu0 0
    %359 = vmatprep.subr.bf16.mxu0 0
    %360 = vmatpush1.bf16.msra.mxu0 0
    %361 = vmatprep.subr.bf16.mxu0 0
    %362 = vmatpush1.bf16.msra.mxu0 0
    %363 = vmatprep.subr.bf16.mxu0 0
    %364 = vmatpush1.bf16.msra.mxu0 0
    %365 = vmatprep.subr.bf16.mxu0 0
    %366 = vmatpush1.bf16.msra.mxu0 0
    %367 = vmatprep.subr.bf16.mxu0 0
    %368 = vmatpush1.bf16.msra.mxu0 0
    %369 = vmatprep.subr.bf16.mxu0 0
    %370 = vmatpush1.bf16.msra.mxu0 0
    %371 = vmatprep.mubr.bf16.mxu0 0
    %372 = vmatmul.mubr.bf16.gmra.mrb[0].mxu0 %v338
    %v373 = vpop.f32.mrb[0].mxu0
    %v374 = vadd.f32 0.0, %v373
    %v375 = vpop.f32.mrb[0].mxu0
    %v376 = vadd.f32 0.0, %v375
    %v377 = vpop.f32.mrb[0].mxu0
    %v378 = vpop.f32.mrb[0].mxu0
    %379 = vdwg.mxu0
    %380 = vmatprep.subr.bf16.mxu0 0
    %381 = vmatpush1.bf16.msra.mxu0 %v184
    %382 = vmatprep.subr.bf16.mxu0 0
    %383 = vmatpush1.bf16.msra.mxu0 %v187
    %384 = vmatprep.subr.bf16.mxu0 0
    %385 = vmatpush1.bf16.msra.mxu0 %v190
    %386 = vmatprep.subr.bf16.mxu0 0
    %387 = vmatpush1.bf16.msra.mxu0 %v193
    %388 = vmatprep.subr.bf16.mxu0 0
    %389 = vmatpush1.bf16.msra.mxu0 %v196
    %390 = vmatprep.subr.bf16.mxu0 0
    %391 = vmatpush1.bf16.msra.mxu0 %v199
    %392 = vmatprep.subr.bf16.mxu0 0
    %393 = vmatpush1.bf16.msra.mxu0 %v202
    %394 = vmatprep.subr.bf16.mxu0 0
    %395 = vmatpush1.bf16.msra.mxu0 %v205
    %396 = vmatprep.subr.bf16.mxu0 0
    %397 = vmatpush1.bf16.msra.mxu0 0
    %398 = vmatprep.subr.bf16.mxu0 0
    %399 = vmatpush1.bf16.msra.mxu0 0
    %400 = vmatprep.subr.bf16.mxu0 0
    %401 = vmatpush1.bf16.msra.mxu0 0
    %402 = vmatprep.subr.bf16.mxu0 0
    %403 = vmatpush1.bf16.msra.mxu0 0
    %404 = vmatprep.subr.bf16.mxu0 0
    %405 = vmatpush1.bf16.msra.mxu0 0
    %406 = vmatprep.subr.bf16.mxu0 0
    %407 = vmatpush1.bf16.msra.mxu0 0
    %408 = vmatprep.subr.bf16.mxu0 0
    %409 = vmatpush1.bf16.msra.mxu0 0
    %410 = vmatprep.subr.bf16.mxu0 0
    %411 = vmatpush1.bf16.msra.mxu0 0
    %412 = vmatprep.mubr.bf16.mxu0 0
    %413 = vmatmul.mubr.bf16.gmra.mrb[0].mxu0 %v338
    %v414 = vpop.f32.mrb[0].mxu0
    %v415 = vadd.f32 0.0, %v414
    %v416 = vpop.f32.mrb[0].mxu0
    %v417 = vpop.f32.mrb[0].mxu0
    %v418 = vpop.f32.mrb[0].mxu0
    %419 = vdwg.mxu0
    %v420 = vadd.f32 %v335, %v374
    %v421 = vxor.u32 %v420, 2147483648
    %v422 = vmul.f32 %v421, 1.442695
    %v423 = vpow.pop %v422
    %v424 = vadd.f32 %v423, 1.0
    %v425 = vrcp.pop %v424
    %v426 = vmul.f32 1.0, %v425
    %v427 = vadd.f32 %v336, %v376
    %v428 = vxor.u32 %v427, 2147483648
    %v429 = vmul.f32 %v428, 1.442695
    %v430 = vpow.pop %v429
    %v431 = vadd.f32 %v430, 1.0
    %v432 = vrcp.pop %v431
    %v433 = vmul.f32 1.0, %v432
    %v434 = vadd.f32 %v415, %v95
    %v435 = vmul.f32 %v426, %v434
    %v436 = vadd.f32 %v337, %v435
    %v437 = vtanh.pop %v436
    %v438 = vsub.f32 1.0, %v433
    %v439 = vmul.f32 %v438, %v437
    %v440 = vmul.f32 %v433, %v332
    %v441 = vadd.f32 %v439, %v440
    %s442 = scalar_lea.vmem [#allocation8], 8
    %443 = vst [vmem:[%s442] sm:$0xff] %v441
    %s444 = scalar_lea.vmem [#allocation2], 48
    %v445 = vld [vmem:[%s444] sm:$0xff]
    %v446 = vld [vmem:[%s444 + $0x8] sm:$0xff]
    %v447 = vld [vmem:[%s444 + $0x10] sm:$0xff]
    %v448 = vpack.c.bf16 %v441, %v441
    %449 = vmatprep.subr.bf16.mxu0 %v183
    %450 = vmatpush1.bf16.msra.mxu0 %v182
    %451 = vmatprep.subr.bf16.mxu0 %v186
    %452 = vmatpush1.bf16.msra.mxu0 %v185
    %453 = vmatprep.subr.bf16.mxu0 %v189
    %454 = vmatpush1.bf16.msra.mxu0 %v188
    %455 = vmatprep.subr.bf16.mxu0 %v192
    %456 = vmatpush1.bf16.msra.mxu0 %v191
    %457 = vmatprep.subr.bf16.mxu0 %v195
    %458 = vmatpush1.bf16.msra.mxu0 %v194
    %459 = vmatprep.subr.bf16.mxu0 %v198
    %460 = vmatpush1.bf16.msra.mxu0 %v197
    %461 = vmatprep.subr.bf16.mxu0 %v201
    %462 = vmatpush1.bf16.msra.mxu0 %v200
    %463 = vmatprep.subr.bf16.mxu0 %v204
    %464 = vmatpush1.bf16.msra.mxu0 %v203
    %465 = vmatprep.subr.bf16.mxu0 0
    %466 = vmatpush1.bf16.msra.mxu0 0
    %467 = vmatprep.subr.bf16.mxu0 0
    %468 = vmatpush1.bf16.msra.mxu0 0
    %469 = vmatprep.subr.bf16.mxu0 0
    %470 = vmatpush1.bf16.msra.mxu0 0
    %471 = vmatprep.subr.bf16.mxu0 0
    %472 = vmatpush1.bf16.msra.mxu0 0
    %473 = vmatprep.subr.bf16.mxu0 0
    %474 = vmatpush1.bf16.msra.mxu0 0
    %475 = vmatprep.subr.bf16.mxu0 0
    %476 = vmatpush1.bf16.msra.mxu0 0
    %477 = vmatprep.subr.bf16.mxu0 0
    %478 = vmatpush1.bf16.msra.mxu0 0
    %479 = vmatprep.subr.bf16.mxu0 0
    %480 = vmatpush1.bf16.msra.mxu0 0
    %481 = vmatprep.mubr.bf16.mxu0 0
    %482 = vmatmul.mubr.bf16.gmra.mrb[0].mxu0 %v448
    %v483 = vpop.f32.mrb[0].mxu0
    %v484 = vadd.f32 0.0, %v483
    %v485 = vpop.f32.mrb[0].mxu0
    %v486 = vadd.f32 0.0, %v485
    %v487 = vpop.f32.mrb[0].mxu0
    %v488 = vpop.f32.mrb[0].mxu0
    %489 = vdwg.mxu0
    %490 = vmatprep.subr.bf16.mxu0 0
    %491 = vmatpush1.bf16.msra.mxu0 %v184
    %492 = vmatprep.subr.bf16.mxu0 0
    %493 = vmatpush1.bf16.msra.mxu0 %v187
    %494 = vmatprep.subr.bf16.mxu0 0
    %495 = vmatpush1.bf16.msra.mxu0 %v190
    %496 = vmatprep.subr.bf16.mxu0 0
    %497 = vmatpush1.bf16.msra.mxu0 %v193
    %498 = vmatprep.subr.bf16.mxu0 0
    %499 = vmatpush1.bf16.msra.mxu0 %v196
    %500 = vmatprep.subr.bf16.mxu0 0
    %501 = vmatpush1.bf16.msra.mxu0 %v199
    %502 = vmatprep.subr.bf16.mxu0 0
    %503 = vmatpush1.bf16.msra.mxu0 %v202
    %504 = vmatprep.subr.bf16.mxu0 0
    %505 = vmatpush1.bf16.msra.mxu0 %v205
    %506 = vmatprep.subr.bf16.mxu0 0
    %507 = vmatpush1.bf16.msra.mxu0 0
    %508 = vmatprep.subr.bf16.mxu0 0
    %509 = vmatpush1.bf16.msra.mxu0 0
    %510 = vmatprep.subr.bf16.mxu0 0
    %511 = vmatpush1.bf16.msra.mxu0 0
    %512 = vmatprep.subr.bf16.mxu0 0
    %513 = vmatpush1.bf16.msra.mxu0 0
    %514 = vmatprep.subr.bf16.mxu0 0
    %515 = vmatpush1.bf16.msra.mxu0 0
    %516 = vmatprep.subr.bf16.mxu0 0
    %517 = vmatpush1.bf16.msra.mxu0 0
    %518 = vmatprep.subr.bf16.mxu0 0
    %519 = vmatpush1.bf16.msra.mxu0 0
    %520 = vmatprep.subr.bf16.mxu0 0
    %521 = vmatpush1.bf16.msra.mxu0 0
    %522 = vmatprep.mubr.bf16.mxu0 0
    %523 = vmatmul.mubr.bf16.gmra.mrb[0].mxu0 %v448
    %v524 = vpop.f32.mrb[0].mxu0
    %v525 = vadd.f32 0.0, %v524
    %v526 = vpop.f32.mrb[0].mxu0
    %v527 = vpop.f32.mrb[0].mxu0
    %v528 = vpop.f32.mrb[0].mxu0
    %529 = vdwg.mxu0
    %v530 = vadd.f32 %v445, %v484
    %v531 = vxor.u32 %v530, 2147483648
    %v532 = vmul.f32 %v531, 1.442695
    %v533 = vpow.pop %v532
    %v534 = vadd.f32 %v533, 1.0
    %v535 = vrcp.pop %v534
    %v536 = vmul.f32 1.0, %v535
    %v537 = vadd.f32 %v446, %v486
    %v538 = vxor.u32 %v537, 2147483648
    %v539 = vmul.f32 %v538, 1.442695
    %v540 = vpow.pop %v539
    %v541 = vadd.f32 %v540, 1.0
    %v542 = vrcp.pop %v541
    %v543 = vmul.f32 1.0, %v542
    %v544 = vadd.f32 %v525, %v95
    %v545 = vmul.f32 %v536, %v544
    %v546 = vadd.f32 %v447, %v545
    %v547 = vtanh.pop %v546
    %v548 = vsub.f32 1.0, %v543
    %v549 = vmul.f32 %v548, %v547
    %v550 = vmul.f32 %v543, %v441
    %v551 = vadd.f32 %v549, %v550
    %s552 = scalar_lea.vmem [#allocation8], 16
    %553 = vst [vmem:[%s552] sm:$0xff] %v551
    %s554 = scalar_lea.vmem [#allocation2], 72
    %v555 = vld [vmem:[%s554] sm:$0xff]
    %v556 = vld [vmem:[%s554 + $0x8] sm:$0xff]
    %v557 = vld [vmem:[%s554 + $0x10] sm:$0xff]
    %v558 = vpack.c.bf16 %v551, %v551
    %559 = vmatprep.subr.bf16.mxu0 %v183
    %560 = vmatpush1.bf16.msra.mxu0 %v182
    %561 = vmatprep.subr.bf16.mxu0 %v186
    %562 = vmatpush1.bf16.msra.mxu0 %v185
    %563 = vmatprep.subr.bf16.mxu0 %v189
    %564 = vmatpush1.bf16.msra.mxu0 %v188
    %565 = vmatprep.subr.bf16.mxu0 %v192
    %566 = vmatpush1.bf16.msra.mxu0 %v191
    %567 = vmatprep.subr.bf16.mxu0 %v195
    %568 = vmatpush1.bf16.msra.mxu0 %v194
    %569 = vmatprep.subr.bf16.mxu0 %v198
    %570 = vmatpush1.bf16.msra.mxu0 %v197
    %571 = vmatprep.subr.bf16.mxu0 %v201
    %572 = vmatpush1.bf16.msra.mxu0 %v200
    %573 = vmatprep.subr.bf16.mxu0 %v204
    %574 = vmatpush1.bf16.msra.mxu0 %v203
    %575 = vmatprep.subr.bf16.mxu0 0
    %576 = vmatpush1.bf16.msra.mxu0 0
    %577 = vmatprep.subr.bf16.mxu0 0
    %578 = vmatpush1.bf16.msra.mxu0 0
    %579 = vmatprep.subr.bf16.mxu0 0
    %580 = vmatpush1.bf16.msra.mxu0 0
    %581 = vmatprep.subr.bf16.mxu0 0
    %582 = vmatpush1.bf16.msra.mxu0 0
    %583 = vmatprep.subr.bf16.mxu0 0
    %584 = vmatpush1.bf16.msra.mxu0 0
    %585 = vmatprep.subr.bf16.mxu0 0
    %586 = vmatpush1.bf16.msra.mxu0 0
    %587 = vmatprep.subr.bf16.mxu0 0
    %588 = vmatpush1.bf16.msra.mxu0 0
    %589 = vmatprep.subr.bf16.mxu0 0
    %590 = vmatpush1.bf16.msra.mxu0 0
    %591 = vmatprep.mubr.bf16.mxu0 0
    %592 = vmatmul.mubr.bf16.gmra.mrb[0].mxu0 %v558
    %v593 = vpop.f32.mrb[0].mxu0
    %v594 = vadd.f32 0.0, %v593
    %v595 = vpop.f32.mrb[0].mxu0
    %v596 = vadd.f32 0.0, %v595
    %v597 = vpop.f32.mrb[0].mxu0
    %v598 = vpop.f32.mrb[0].mxu0
    %599 = vdwg.mxu0
    %600 = vmatprep.subr.bf16.mxu0 0
    %601 = vmatpush1.bf16.msra.mxu0 %v184
    %602 = vmatprep.subr.bf16.mxu0 0
    %603 = vmatpush1.bf16.msra.mxu0 %v187
    %604 = vmatprep.subr.bf16.mxu0 0
    %605 = vmatpush1.bf16.msra.mxu0 %v190
    %606 = vmatprep.subr.bf16.mxu0 0
    %607 = vmatpush1.bf16.msra.mxu0 %v193
    %608 = vmatprep.subr.bf16.mxu0 0
    %609 = vmatpush1.bf16.msra.mxu0 %v196
    %610 = vmatprep.subr.bf16.mxu0 0
    %611 = vmatpush1.bf16.msra.mxu0 %v199
    %612 = vmatprep.subr.bf16.mxu0 0
    %613 = vmatpush1.bf16.msra.mxu0 %v202
    %614 = vmatprep.subr.bf16.mxu0 0
    %615 = vmatpush1.bf16.msra.mxu0 %v205
    %616 = vmatprep.subr.bf16.mxu0 0
    %617 = vmatpush1.bf16.msra.mxu0 0
    %618 = vmatprep.subr.bf16.mxu0 0
    %619 = vmatpush1.bf16.msra.mxu0 0
    %620 = vmatprep.subr.bf16.mxu0 0
    %621 = vmatpush1.bf16.msra.mxu0 0
    %622 = vmatprep.subr.bf16.mxu0 0
    %623 = vmatpush1.bf16.msra.mxu0 0
    %624 = vmatprep.subr.bf16.mxu0 0
    %625 = vmatpush1.bf16.msra.mxu0 0
    %626 = vmatprep.subr.bf16.mxu0 0
    %627 = vmatpush1.bf16.msra.mxu0 0
    %628 = vmatprep.subr.bf16.mxu0 0
    %629 = vmatpush1.bf16.msra.mxu0 0
    %630 = vmatprep.subr.bf16.mxu0 0
    %631 = vmatpush1.bf16.msra.mxu0 0
    %632 = vmatprep.mubr.bf16.mxu0 0
    %633 = vmatmul.mubr.bf16.gmra.mrb[0].mxu0 %v558
    %v634 = vpop.f32.mrb[0].mxu0
    %v635 = vadd.f32 0.0, %v634
    %v636 = vpop.f32.mrb[0].mxu0
    %v637 = vpop.f32.mrb[0].mxu0
    %v638 = vpop.f32.mrb[0].mxu0
    %639 = vdwg.mxu0
    %v640 = vadd.f32 %v555, %v594
    %v641 = vxor.u32 %v640, 2147483648
    %v642 = vmul.f32 %v641, 1.442695
    %v643 = vpow.pop %v642
    %v644 = vadd.f32 %v643, 1.0
    %v645 = vrcp.pop %v644
    %v646 = vmul.f32 1.0, %v645
    %v647 = vadd.f32 %v556, %v596
    %v648 = vxor.u32 %v647, 2147483648
    %v649 = vmul.f32 %v648, 1.442695
    %v650 = vpow.pop %v649
    %v651 = vadd.f32 %v650, 1.0
    %v652 = vrcp.pop %v651
    %v653 = vmul.f32 1.0, %v652
    %v654 = vadd.f32 %v635, %v95
    %v655 = vmul.f32 %v646, %v654
    %v656 = vadd.f32 %v557, %v655
    %v657 = vtanh.pop %v656
    %v658 = vsub.f32 1.0, %v653
    %v659 = vmul.f32 %v658, %v657
    %v660 = vmul.f32 %v653, %v551
    %v661 = vadd.f32 %v659, %v660
    %s662 = scalar_lea.vmem [#allocation8], 24
    %663 = vst [vmem:[%s662] sm:$0xff] %v661
    %s664 = scalar_lea.vmem [#allocation2], 96
    %v665 = vld [vmem:[%s664] sm:$0xff]
    %v666 = vld [vmem:[%s664 + $0x8] sm:$0xff]
    %v667 = vld [vmem:[%s664 + $0x10] sm:$0xff]
    %v668 = vpack.c.bf16 %v661, %v661
    %669 = vmatprep.subr.bf16.mxu0 %v183
    %670 = vmatpush1.bf16.msra.mxu0 %v182
    %671 = vmatprep.subr.bf16.mxu0 %v186
    %672 = vmatpush1.bf16.msra.mxu0 %v185
    %673 = vmatprep.subr.bf16.mxu0 %v189
    %674 = vmatpush1.bf16.msra.mxu0 %v188
    %675 = vmatprep.subr.bf16.mxu0 %v192
    %676 = vmatpush1.bf16.msra.mxu0 %v191
    %677 = vmatprep.subr.bf16.mxu0 %v195
    %678 = vmatpush1.bf16.msra.mxu0 %v194
    %679 = vmatprep.subr.bf16.mxu0 %v198
    %680 = vmatpush1.bf16.msra.mxu0 %v197
    %681 = vmatprep.subr.bf16.mxu0 %v201
    %682 = vmatpush1.bf16.msra.mxu0 %v200
    %683 = vmatprep.subr.bf16.mxu0 %v204
    %684 = vmatpush1.bf16.msra.mxu0 %v203
    %685 = vmatprep.subr.bf16.mxu0 0
    %686 = vmatpush1.bf16.msra.mxu0 0
    %687 = vmatprep.subr.bf16.mxu0 0
    %688 = vmatpush1.bf16.msra.mxu0 0
    %689 = vmatprep.subr.bf16.mxu0 0
    %690 = vmatpush1.bf16.msra.mxu0 0
    %691 = vmatprep.subr.bf16.mxu0 0
    %692 = vmatpush1.bf16.msra.mxu0 0
    %693 = vmatprep.subr.bf16.mxu0 0
    %694 = vmatpush1.bf16.msra.mxu0 0
    %695 = vmatprep.subr.bf16.mxu0 0
    %696 = vmatpush1.bf16.msra.mxu0 0
    %697 = vmatprep.subr.bf16.mxu0 0
    %698 = vmatpush1.bf16.msra.mxu0 0
    %699 = vmatprep.subr.bf16.mxu0 0
    %700 = vmatpush1.bf16.msra.mxu0 0
    %701 = vmatprep.mubr.bf16.mxu0 0
    %702 = vmatmul.mubr.bf16.gmra.mrb[0].mxu0 %v668
    %v703 = vpop.f32.mrb[0].mxu0
    %v704 = vadd.f32 0.0, %v703
    %v705 = vpop.f32.mrb[0].mxu0
    %v706 = vadd.f32 0.0, %v705
    %v707 = vpop.f32.mrb[0].mxu0
    %v708 = vpop.f32.mrb[0].mxu0
    %709 = vdwg.mxu0
    %710 = vmatprep.subr.bf16.mxu0 0
    %711 = vmatpush1.bf16.msra.mxu0 %v184
    %712 = vmatprep.subr.bf16.mxu0 0
    %713 = vmatpush1.bf16.msra.mxu0 %v187
    %714 = vmatprep.subr.bf16.mxu0 0
    %715 = vmatpush1.bf16.msra.mxu0 %v190
    %716 = vmatprep.subr.bf16.mxu0 0
    %717 = vmatpush1.bf16.msra.mxu0 %v193
    %718 = vmatprep.subr.bf16.mxu0 0
    %719 = vmatpush1.bf16.msra.mxu0 %v196
    %720 = vmatprep.subr.bf16.mxu0 0
    %721 = vmatpush1.bf16.msra.mxu0 %v199
    %722 = vmatprep.subr.bf16.mxu0 0
    %723 = vmatpush1.bf16.msra.mxu0 %v202
    %724 = vmatprep.subr.bf16.mxu0 0
    %725 = vmatpush1.bf16.msra.mxu0 %v205
    %726 = vmatprep.subr.bf16.mxu0 0
    %727 = vmatpush1.bf16.msra.mxu0 0
    %728 = vmatprep.subr.bf16.mxu0 0
    %729 = vmatpush1.bf16.msra.mxu0 0
    %730 = vmatprep.subr.bf16.mxu0 0
    %731 = vmatpush1.bf16.msra.mxu0 0
    %732 = vmatprep.subr.bf16.mxu0 0
    %733 = vmatpush1.bf16.msra.mxu0 0
    %734 = vmatprep.subr.bf16.mxu0 0
    %735 = vmatpush1.bf16.msra.mxu0 0
    %736 = vmatprep.subr.bf16.mxu0 0
    %737 = vmatpush1.bf16.msra.mxu0 0
    %738 = vmatprep.subr.bf16.mxu0 0
    %739 = vmatpush1.bf16.msra.mxu0 0
    %740 = vmatprep.subr.bf16.mxu0 0
    %741 = vmatpush1.bf16.msra.mxu0 0
    %742 = vmatprep.mubr.bf16.mxu0 0
    %743 = vmatmul.mubr.bf16.gmra.mrb[0].mxu0 %v668
    %v744 = vpop.f32.mrb[0].mxu0
    %v745 = vadd.f32 0.0, %v744
    %v746 = vpop.f32.mrb[0].mxu0
    %v747 = vpop.f32.mrb[0].mxu0
    %v748 = vpop.f32.mrb[0].mxu0
    %749 = vdwg.mxu0
    %v750 = vadd.f32 %v665, %v704
    %v751 = vxor.u32 %v750, 2147483648
    %v752 = vmul.f32 %v751, 1.442695
    %v753 = vpow.pop %v752
    %v754 = vadd.f32 %v753, 1.0
    %v755 = vrcp.pop %v754
    %v756 = vmul.f32 1.0, %v755
    %v757 = vadd.f32 %v666, %v706
    %v758 = vxor.u32 %v757, 2147483648
    %v759 = vmul.f32 %v758, 1.442695
    %v760 = vpow.pop %v759
    %v761 = vadd.f32 %v760, 1.0
    %v762 = vrcp.pop %v761
    %v763 = vmul.f32 1.0, %v762
    %v764 = vadd.f32 %v745, %v95
    %v765 = vmul.f32 %v756, %v764
    %v766 = vadd.f32 %v667, %v765
    %v767 = vtanh.pop %v766
    %v768 = vsub.f32 1.0, %v763
    %v769 = vmul.f32 %v768, %v767
    %v770 = vmul.f32 %v763, %v661
    %v771 = vadd.f32 %v769, %v770
    %s772 = scalar_lea.vmem [#allocation8], 32
    %773 = vst [vmem:[%s772] sm:$0xff] %v771
    %s774 = scalar_lea.vmem [#allocation2], 120
    %v775 = vld [vmem:[%s774] sm:$0xff]
    %v776 = vld [vmem:[%s774 + $0x8] sm:$0xff]
    %v777 = vld [vmem:[%s774 + $0x10] sm:$0xff]
    %v778 = vpack.c.bf16 %v771, %v771
    %779 = vmatprep.subr.bf16.mxu0 %v183
    %780 = vmatpush1.bf16.msra.mxu0 %v182
    %781 = vmatprep.subr.bf16.mxu0 %v186
    %782 = vmatpush1.bf16.msra.mxu0 %v185
    %783 = vmatprep.subr.bf16.mxu0 %v189
    %784 = vmatpush1.bf16.msra.mxu0 %v188
    %785 = vmatprep.subr.bf16.mxu0 %v192
    %786 = vmatpush1.bf16.msra.mxu0 %v191
    %787 = vmatprep.subr.bf16.mxu0 %v195
    %788 = vmatpush1.bf16.msra.mxu0 %v194
    %789 = vmatprep.subr.bf16.mxu0 %v198
    %790 = vmatpush1.bf16.msra.mxu0 %v197
    %791 = vmatprep.subr.bf16.mxu0 %v201
    %792 = vmatpush1.bf16.msra.mxu0 %v200
    %793 = vmatprep.subr.bf16.mxu0 %v204
    %794 = vmatpush1.bf16.msra.mxu0 %v203
    %795 = vmatprep.subr.bf16.mxu0 0
    %796 = vmatpush1.bf16.msra.mxu0 0
    %797 = vmatprep.subr.bf16.mxu0 0
    %798 = vmatpush1.bf16.msra.mxu0 0
    %799 = vmatprep.subr.bf16.mxu0 0
    %800 = vmatpush1.bf16.msra.mxu0 0
    %801 = vmatprep.subr.bf16.mxu0 0
    %802 = vmatpush1.bf16.msra.mxu0 0
    %803 = vmatprep.subr.bf16.mxu0 0
    %804 = vmatpush1.bf16.msra.mxu0 0
    %805 = vmatprep.subr.bf16.mxu0 0
    %806 = vmatpush1.bf16.msra.mxu0 0
    %807 = vmatprep.subr.bf16.mxu0 0
    %808 = vmatpush1.bf16.msra.mxu0 0
    %809 = vmatprep.subr.bf16.mxu0 0
    %810 = vmatpush1.bf16.msra.mxu0 0
    %811 = vmatprep.mubr.bf16.mxu0 0
    %812 = vmatmul.mubr.bf16.gmra.mrb[0].mxu0 %v778
    %v813 = vpop.f32.mrb[0].mxu0
    %v814 = vadd.f32 0.0, %v813
    %v815 = vpop.f32.mrb[0].mxu0
    %v816 = vadd.f32 0.0, %v815
    %v817 = vpop.f32.mrb[0].mxu0
    %v818 = vpop.f32.mrb[0].mxu0
    %819 = vdwg.mxu0
    %820 = vmatprep.subr.bf16.mxu0 0
    %821 = vmatpush1.bf16.msra.mxu0 %v184
    %822 = vmatprep.subr.bf16.mxu0 0
    %823 = vmatpush1.bf16.msra.mxu0 %v187
    %824 = vmatprep.subr.bf16.mxu0 0
    %825 = vmatpush1.bf16.msra.mxu0 %v190
    %826 = vmatprep.subr.bf16.mxu0 0
    %827 = vmatpush1.bf16.msra.mxu0 %v193
    %828 = vmatprep.subr.bf16.mxu0 0
    %829 = vmatpush1.bf16.msra.mxu0 %v196
    %830 = vmatprep.subr.bf16.mxu0 0
    %831 = vmatpush1.bf16.msra.mxu0 %v199
    %832 = vmatprep.subr.bf16.mxu0 0
    %833 = vmatpush1.bf16.msra.mxu0 %v202
    %834 = vmatprep.subr.bf16.mxu0 0
    %835 = vmatpush1.bf16.msra.mxu0 %v205
    %836 = vmatprep.subr.bf16.mxu0 0
    %837 = vmatpush1.bf16.msra.mxu0 0
    %838 = vmatprep.subr.bf16.mxu0 0
    %839 = vmatpush1.bf16.msra.mxu0 0
    %840 = vmatprep.subr.bf16.mxu0 0
    %841 = vmatpush1.bf16.msra.mxu0 0
    %842 = vmatprep.subr.bf16.mxu0 0
    %843 = vmatpush1.bf16.msra.mxu0 0
    %844 = vmatprep.subr.bf16.mxu0 0
    %845 = vmatpush1.bf16.msra.mxu0 0
    %846 = vmatprep.subr.bf16.mxu0 0
    %847 = vmatpush1.bf16.msra.mxu0 0
    %848 = vmatprep.subr.bf16.mxu0 0
    %849 = vmatpush1.bf16.msra.mxu0 0
    %850 = vmatprep.subr.bf16.mxu0 0
    %851 = vmatpush1.bf16.msra.mxu0 0
    %852 = vmatprep.mubr.bf16.mxu0 0
    %853 = vmatmul.mubr.bf16.gmra.mrb[0].mxu0 %v778
    %v854 = vpop.f32.mrb[0].mxu0
    %v855 = vadd.f32 0.0, %v854
    %v856 = vpop.f32.mrb[0].mxu0
    %v857 = vpop.f32.mrb[0].mxu0
    %v858 = vpop.f32.mrb[0].mxu0
    %859 = vdwg.mxu0
    %v860 = vadd.f32 %v775, %v814
    %v861 = vxor.u32 %v860, 2147483648
    %v862 = vmul.f32 %v861, 1.442695
    %v863 = vpow.pop %v862
    %v864 = vadd.f32 %v863, 1.0
    %v865 = vrcp.pop %v864
    %v866 = vmul.f32 1.0, %v865
    %v867 = vadd.f32 %v776, %v816
    %v868 = vxor.u32 %v867, 2147483648
    %v869 = vmul.f32 %v868, 1.442695
    %v870 = vpow.pop %v869
    %v871 = vadd.f32 %v870, 1.0
    %v872 = vrcp.pop %v871
    %v873 = vmul.f32 1.0, %v872
    %v874 = vadd.f32 %v855, %v95
    %v875 = vmul.f32 %v866, %v874
    %v876 = vadd.f32 %v777, %v875
    %v877 = vtanh.pop %v876
    %v878 = vsub.f32 1.0, %v873
    %v879 = vmul.f32 %v878, %v877
    %v880 = vmul.f32 %v873, %v771
    %v881 = vadd.f32 %v879, %v880
    %s882 = scalar_lea.vmem [#allocation8], 40
    %883 = vst [vmem:[%s882] sm:$0xff] %v881
    %s884 = scalar_lea.vmem [#allocation2], 144
    %v885 = vld [vmem:[%s884] sm:$0xff]
    %v886 = vld [vmem:[%s884 + $0x8] sm:$0xff]
    %v887 = vld [vmem:[%s884 + $0x10] sm:$0xff]
    %v888 = vpack.c.bf16 %v881, %v881
    %889 = vmatprep.subr.bf16.mxu0 %v183
    %890 = vmatpush1.bf16.msra.mxu0 %v182
    %891 = vmatprep.subr.bf16.mxu0 %v186
    %892 = vmatpush1.bf16.msra.mxu0 %v185
    %893 = vmatprep.subr.bf16.mxu0 %v189
    %894 = vmatpush1.bf16.msra.mxu0 %v188
    %895 = vmatprep.subr.bf16.mxu0 %v192
    %896 = vmatpush1.bf16.msra.mxu0 %v191
    %897 = vmatprep.subr.bf16.mxu0 %v195
    %898 = vmatpush1.bf16.msra.mxu0 %v194
    %899 = vmatprep.subr.bf16.mxu0 %v198
    %900 = vmatpush1.bf16.msra.mxu0 %v197
    %901 = vmatprep.subr.bf16.mxu0 %v201
    %902 = vmatpush1.bf16.msra.mxu0 %v200
    %903 = vmatprep.subr.bf16.mxu0 %v204
    %904 = vmatpush1.bf16.msra.mxu0 %v203
    %905 = vmatprep.subr.bf16.mxu0 0
    %906 = vmatpush1.bf16.msra.mxu0 0
    %907 = vmatprep.subr.bf16.mxu0 0
    %908 = vmatpush1.bf16.msra.mxu0 0
    %909 = vmatprep.subr.bf16.mxu0 0
    %910 = vmatpush1.bf16.msra.mxu0 0
    %911 = vmatprep.subr.bf16.mxu0 0
    %912 = vmatpush1.bf16.msra.mxu0 0
    %913 = vmatprep.subr.bf16.mxu0 0
    %914 = vmatpush1.bf16.msra.mxu0 0
    %915 = vmatprep.subr.bf16.mxu0 0
    %916 = vmatpush1.bf16.msra.mxu0 0
    %917 = vmatprep.subr.bf16.mxu0 0
    %918 = vmatpush1.bf16.msra.mxu0 0
    %919 = vmatprep.subr.bf16.mxu0 0
    %920 = vmatpush1.bf16.msra.mxu0 0
    %921 = vmatprep.mubr.bf16.mxu0 0
    %922 = vmatmul.mubr.bf16.gmra.mrb[0].mxu0 %v888
    %v923 = vpop.f32.mrb[0].mxu0
    %v924 = vadd.f32 0.0, %v923
    %v925 = vpop.f32.mrb[0].mxu0
    %v926 = vadd.f32 0.0, %v925
    %v927 = vpop.f32.mrb[0].mxu0
    %v928 = vpop.f32.mrb[0].mxu0
    %929 = vdwg.mxu0
    %930 = vmatprep.subr.bf16.mxu0 0
    %931 = vmatpush1.bf16.msra.mxu0 %v184
    %932 = vmatprep.subr.bf16.mxu0 0
    %933 = vmatpush1.bf16.msra.mxu0 %v187
    %934 = vmatprep.subr.bf16.mxu0 0
    %935 = vmatpush1.bf16.msra.mxu0 %v190
    %936 = vmatprep.subr.bf16.mxu0 0
    %937 = vmatpush1.bf16.msra.mxu0 %v193
    %938 = vmatprep.subr.bf16.mxu0 0
    %939 = vmatpush1.bf16.msra.mxu0 %v196
    %940 = vmatprep.subr.bf16.mxu0 0
    %941 = vmatpush1.bf16.msra.mxu0 %v199
    %942 = vmatprep.subr.bf16.mxu0 0
    %943 = vmatpush1.bf16.msra.mxu0 %v202
    %944 = vmatprep.subr.bf16.mxu0 0
    %945 = vmatpush1.bf16.msra.mxu0 %v205
    %946 = vmatprep.subr.bf16.mxu0 0
    %947 = vmatpush1.bf16.msra.mxu0 0
    %948 = vmatprep.subr.bf16.mxu0 0
    %949 = vmatpush1.bf16.msra.mxu0 0
    %950 = vmatprep.subr.bf16.mxu0 0
    %951 = vmatpush1.bf16.msra.mxu0 0
    %952 = vmatprep.subr.bf16.mxu0 0
    %953 = vmatpush1.bf16.msra.mxu0 0
    %954 = vmatprep.subr.bf16.mxu0 0
    %955 = vmatpush1.bf16.msra.mxu0 0
    %956 = vmatprep.subr.bf16.mxu0 0
    %957 = vmatpush1.bf16.msra.mxu0 0
    %958 = vmatprep.subr.bf16.mxu0 0
    %959 = vmatpush1.bf16.msra.mxu0 0
    %960 = vmatprep.subr.bf16.mxu0 0
    %961 = vmatpush1.bf16.msra.mxu0 0
    %962 = vmatprep.mubr.bf16.mxu0 0
    %963 = vmatmul.mubr.bf16.gmra.mrb[0].mxu0 %v888
    %v964 = vpop.f32.mrb[0].mxu0
    %v965 = vadd.f32 0.0, %v964
    %v966 = vpop.f32.mrb[0].mxu0
    %v967 = vpop.f32.mrb[0].mxu0
    %v968 = vpop.f32.mrb[0].mxu0
    %969 = vdwg.mxu0
    %v970 = vadd.f32 %v885, %v924
    %v971 = vxor.u32 %v970, 2147483648
    %v972 = vmul.f32 %v971, 1.442695
    %v973 = vpow.pop %v972
    %v974 = vadd.f32 %v973, 1.0
    %v975 = vrcp.pop %v974
    %v976 = vmul.f32 1.0, %v975
    %v977 = vadd.f32 %v886, %v926
    %v978 = vxor.u32 %v977, 2147483648
    %v979 = vmul.f32 %v978, 1.442695
    %v980 = vpow.pop %v979
    %v981 = vadd.f32 %v980, 1.0
    %v982 = vrcp.pop %v981
    %v983 = vmul.f32 1.0, %v982
    %v984 = vadd.f32 %v965, %v95
    %v985 = vmul.f32 %v976, %v984
    %v986 = vadd.f32 %v887, %v985
    %v987 = vtanh.pop %v986
    %v988 = vsub.f32 1.0, %v983
    %v989 = vmul.f32 %v988, %v987
    %v990 = vmul.f32 %v983, %v881
    %v991 = vadd.f32 %v989, %v990
    %s992 = scalar_lea.vmem [#allocation8], 48
    %993 = vst [vmem:[%s992] sm:$0xff] %v991
    %s994 = scalar_lea.vmem [#allocation2], 168
    %v995 = vld [vmem:[%s994] sm:$0xff]
    %v996 = vld [vmem:[%s994 + $0x8] sm:$0xff]
    %v997 = vld [vmem:[%s994 + $0x10] sm:$0xff]
    %v998 = vpack.c.bf16 %v991, %v991
    %999 = vmatprep.subr.bf16.mxu0 %v183
    %1000 = vmatpush1.bf16.msra.mxu0 %v182
    %1001 = vmatprep.subr.bf16.mxu0 %v186
    %1002 = vmatpush1.bf16.msra.mxu0 %v185
    %1003 = vmatprep.subr.bf16.mxu0 %v189
    %1004 = vmatpush1.bf16.msra.mxu0 %v188
    %1005 = vmatprep.subr.bf16.mxu0 %v192
    %1006 = vmatpush1.bf16.msra.mxu0 %v191
    %1007 = vmatprep.subr.bf16.mxu0 %v195
    %1008 = vmatpush1.bf16.msra.mxu0 %v194
    %1009 = vmatprep.subr.bf16.mxu0 %v198
    %1010 = vmatpush1.bf16.msra.mxu0 %v197
    %1011 = vmatprep.subr.bf16.mxu0 %v201
    %1012 = vmatpush1.bf16.msra.mxu0 %v200
    %1013 = vmatprep.subr.bf16.mxu0 %v204
    %1014 = vmatpush1.bf16.msra.mxu0 %v203
    %1015 = vmatprep.subr.bf16.mxu0 0
    %1016 = vmatpush1.bf16.msra.mxu0 0
    %1017 = vmatprep.subr.bf16.mxu0 0
    %1018 = vmatpush1.bf16.msra.mxu0 0
    %1019 = vmatprep.subr.bf16.mxu0 0
    %1020 = vmatpush1.bf16.msra.mxu0 0
    %1021 = vmatprep.subr.bf16.mxu0 0
    %1022 = vmatpush1.bf16.msra.mxu0 0
    %1023 = vmatprep.subr.bf16.mxu0 0
    %1024 = vmatpush1.bf16.msra.mxu0 0
    %1025 = vmatprep.subr.bf16.mxu0 0
    %1026 = vmatpush1.bf16.msra.mxu0 0
    %1027 = vmatprep.subr.bf16.mxu0 0
    %1028 = vmatpush1.bf16.msra.mxu0 0
    %1029 = vmatprep.subr.bf16.mxu0 0
    %1030 = vmatpush1.bf16.msra.mxu0 0
    %1031 = vmatprep.mubr.bf16.mxu0 0
    %1032 = vmatmul.mubr.bf16.gmra.mrb[0].mxu0 %v998
    %v1033 = vpop.f32.mrb[0].mxu0
    %v1034 = vadd.f32 0.0, %v1033
    %v1035 = vpop.f32.mrb[0].mxu0
    %v1036 = vadd.f32 0.0, %v1035
    %v1037 = vpop.f32.mrb[0].mxu0
    %v1038 = vpop.f32.mrb[0].mxu0
    %1039 = vdwg.mxu0
    %1040 = vmatprep.subr.bf16.mxu0 0
    %1041 = vmatpush1.bf16.msra.mxu0 %v184
    %1042 = vmatprep.subr.bf16.mxu0 0
    %1043 = vmatpush1.bf16.msra.mxu0 %v187
    %1044 = vmatprep.subr.bf16.mxu0 0
    %1045 = vmatpush1.bf16.msra.mxu0 %v190
    %1046 = vmatprep.subr.bf16.mxu0 0
    %1047 = vmatpush1.bf16.msra.mxu0 %v193
    %1048 = vmatprep.subr.bf16.mxu0 0
    %1049 = vmatpush1.bf16.msra.mxu0 %v196
    %1050 = vmatprep.subr.bf16.mxu0 0
    %1051 = vmatpush1.bf16.msra.mxu0 %v199
    %1052 = vmatprep.subr.bf16.mxu0 0
    %1053 = vmatpush1.bf16.msra.mxu0 %v202
    %1054 = vmatprep.subr.bf16.mxu0 0
    %1055 = vmatpush1.bf16.msra.mxu0 %v205
    %1056 = vmatprep.subr.bf16.mxu0 0
    %1057 = vmatpush1.bf16.msra.mxu0 0
    %1058 = vmatprep.subr.bf16.mxu0 0
    %1059 = vmatpush1.bf16.msra.mxu0 0
    %1060 = vmatprep.subr.bf16.mxu0 0
    %1061 = vmatpush1.bf16.msra.mxu0 0
    %1062 = vmatprep.subr.bf16.mxu0 0
    %1063 = vmatpush1.bf16.msra.mxu0 0
    %1064 = vmatprep.subr.bf16.mxu0 0
    %1065 = vmatpush1.bf16.msra.mxu0 0
    %1066 = vmatprep.subr.bf16.mxu0 0
    %1067 = vmatpush1.bf16.msra.mxu0 0
    %1068 = vmatprep.subr.bf16.mxu0 0
    %1069 = vmatpush1.bf16.msra.mxu0 0
    %1070 = vmatprep.subr.bf16.mxu0 0
    %1071 = vmatpush1.bf16.msra.mxu0 0
    %1072 = vmatprep.mubr.bf16.mxu0 0
    %1073 = vmatmul.mubr.bf16.gmra.mrb[0].mxu0 %v998
    %v1074 = vpop.f32.mrb[0].mxu0
    %v1075 = vadd.f32 0.0, %v1074
    %v1076 = vpop.f32.mrb[0].mxu0
    %v1077 = vpop.f32.mrb[0].mxu0
    %v1078 = vpop.f32.mrb[0].mxu0
    %1079 = vdwg.mxu0
    %v1080 = vadd.f32 %v995, %v1034
    %v1081 = vxor.u32 %v1080, 2147483648
    %v1082 = vmul.f32 %v1081, 1.442695
    %v1083 = vpow.pop %v1082
    %v1084 = vadd.f32 %v1083, 1.0
    %v1085 = vrcp.pop %v1084
    %v1086 = vmul.f32 1.0, %v1085
    %v1087 = vadd.f32 %v996, %v1036
    %v1088 = vxor.u32 %v1087, 2147483648
    %v1089 = vmul.f32 %v1088, 1.442695
    %v1090 = vpow.pop %v1089
    %v1091 = vadd.f32 %v1090, 1.0
    %v1092 = vrcp.pop %v1091
    %v1093 = vmul.f32 1.0, %v1092
    %v1094 = vadd.f32 %v1075, %v95
    %v1095 = vmul.f32 %v1086, %v1094
    %v1096 = vadd.f32 %v997, %v1095
    %v1097 = vtanh.pop %v1096
    %v1098 = vsub.f32 1.0, %v1093
    %v1099 = vmul.f32 %v1098, %v1097
    %v1100 = vmul.f32 %v1093, %v991
    %v1101 = vadd.f32 %v1099, %v1100
    %s1102 = scalar_lea.vmem [#allocation8], 56
    %1103 = vst [vmem:[%s1102] sm:$0xff] %v1101
    // Predicated region
    $region30: #{tpu_custom_call.1} parent=1 // pred_check
      _
    $region31: #{tpu_custom_call.1} parent=1 // pred_check_branch
      %1105 = sbr.rel (0) target = $region33
    $region32: #{tpu_custom_call.1} parent=1 // pred_region
      %s1107 = ssub.s32 1024, 1024
      %1108 = vsyncadd [#allocation4], %s1107
      %s1109 = sshll.u32 [#allocation8], 4
      %s1110 = int_to_ptr.vmem [resolvable:$true] %s1109
      %1115 = dma.vmem_to_hbm [thread:$0]  %s1110, 1024, %s4, [#allocation4], 128, 128, 8
    $region33: #{tpu_custom_call.1} parent=1 // pred_fallthru
      _
    // Predicated region
    $region34: #{tpu_custom_call.1} parent=1 // pred_check
      _
    $region35: #{tpu_custom_call.1} parent=1 // pred_check_branch
      %1117 = sbr.rel (0) target = $region37
    $region36: #{tpu_custom_call.1} parent=1 // pred_region
      %1118 = dma.done [#allocation4], 1024
    $region37: #{tpu_custom_call.1} parent=1 // pred_fallthru
      _
    %1119 = vsyncpa [#allocation3], 1
    %1120 = vsyncpa [#allocation6], 1
    %1121 = vsyncpa [#allocation4], 1

</llo_original>
